<compile_context>
chip_gen: v5e
topology: v5e:2x2
jax: 0.10.0
libtpu: 0.0.40
codegen_flags: <defaults>
</compile_context>

<pallas_src>
from functools import partial

import jax
import jax.numpy as jnp
from jax.experimental import pallas as pl
from jax.experimental.pallas import tpu as pltpu


def attention_kernel(x_q_ref, x_kv_ref, wq_ref, wkv_ref, wproj_ref, bproj_ref,
                     o_ref, k_scr, v_scr, *, num_heads):
    """One grid step: (batch b, query tile qi) -> attention output tile."""
    H = num_heads
    _, TQ, C = x_q_ref.shape
    N = x_kv_ref.shape[1]
    Dh = C // H
    cdt = k_scr.dtype                      # MXU compute dtype (bf16 or f32)

    # ---- K/V projection: once per batch element, kept resident in VMEM ----
    @pl.when(pl.program_id(1) == 0)
    def _():
        xb = x_kv_ref[0]                                            # (N, C)
        kv = jnp.dot(xb, wkv_ref[...],
                     preferred_element_type=jnp.float32)            # (N, 2C)
        k = kv[:, :C].reshape(N, H, Dh)
        v = kv[:, C:].reshape(N, H, Dh)
        k_scr[...] = jnp.transpose(k, (1, 0, 2)).astype(cdt)        # (H, N, Dh)
        v_scr[...] = jnp.transpose(v, (1, 0, 2)).astype(cdt)        # (H, N, Dh)

    # ---- Q projection for this query tile (softmax scale pre-folded into wq) ----
    xq = x_q_ref[0]                                                 # (TQ, C)
    q = jnp.dot(xq, wq_ref[...], preferred_element_type=jnp.float32)
    q = jnp.transpose(q.reshape(TQ, H, Dh), (1, 0, 2)).astype(cdt)  # (H, TQ, Dh)

    # ---- head-batched scores + softmax (stats kept in f32) ----
    s = jnp.einsum("hqd,hkd->hqk", q, k_scr[...],
                   preferred_element_type=jnp.float32)              # (H, TQ, N)
    m = jnp.max(s, axis=-1, keepdims=True)
    p = jnp.exp(s - m)                                              # unnormalized
    l = jnp.sum(p, axis=-1, keepdims=True)                          # (H, TQ, 1)

    # ---- head-batched PV; normalization deferred to the small (H,TQ,Dh) result ----
    o = jnp.einsum("hqk,hkd->hqd", p.astype(cdt), v_scr[...],
                   preferred_element_type=jnp.float32)              # (H, TQ, Dh)
    o = o * pl.reciprocal(l, approx=True)                           # EUP, not VALU

    # back to lane-dense (TQ, C), head-major along C (matches PyTorch reshape)
    o = jnp.transpose(o, (1, 0, 2)).reshape(TQ, C)

    # ---- output projection (+ bias, f32) ----
    y = jnp.dot(o.astype(cdt), wproj_ref[...],
                preferred_element_type=jnp.float32) + bproj_ref[...]
    o_ref[0] = y.astype(o_ref.dtype)


def vit_attention(x, w_qkv, w_proj, b_proj, *, num_heads, q_tile=None,
                  compute_dtype=None):
    """Multi-head self-attention matching the PyTorch Attention.forward."""
    B, N, C = x.shape
    assert C % num_heads == 0
    Dh = C // num_heads
    scale = Dh ** (-0.5)
    if compute_dtype is None:
        compute_dtype = x.dtype

    # Host/XLA-side prep (free relative to the kernel):
    #  * split the fused qkv weight into q / kv parts (no in-kernel lane slicing)
    #  * fold the softmax scale into the q projection weight
    #  * cast matmul operands to the MXU compute dtype (bf16 in production)
    w_q = (w_qkv[:, :C] * scale).astype(compute_dtype)           # (C, C)
    w_kv = w_qkv[:, C:].astype(compute_dtype)                    # (C, 2C)
    w_p = w_proj.astype(compute_dtype)                           # (C, C)
    b_p = b_proj.reshape(1, C).astype(jnp.float32)               # (1, C)
    x_c = x.astype(compute_dtype)

    if q_tile is None:
        # Tile queries only when the shapes satisfy the (8,128) layout rule;
        # otherwise process the whole sequence in one grid step.
        q_tile = 256 if (N % 256 == 0 and C % 128 == 0) else N
    assert N % q_tile == 0, "pad N to a multiple of q_tile"
    # TODO(synk): for non-aligned ViT sequence lengths (e.g. N=197), pad N to a
    # multiple of 8/128 and mask the padded key rows to -inf before the softmax.
    # TODO(synk): for very long sequences where (H, N, Dh) K/V no longer fits
    # VMEM, add a KV-tile axis with a flash-style online softmax.
    grid = (B, N // q_tile)

    const = lambda b, qi: (0, 0)
    resident = pl.Buffered(1)   # weight blocks never change -> single-buffer them

    kern = partial(attention_kernel, num_heads=num_heads)
    return pl.pallas_call(
        kern,
        out_shape=jax.ShapeDtypeStruct((B, N, C), x.dtype),
        grid=grid,
        in_specs=[
            pl.BlockSpec((1, q_tile, C), lambda b, qi: (b, qi, 0)),   # x -> Q tile
            pl.BlockSpec((1, N, C), lambda b, qi: (b, 0, 0)),         # x -> K/V
            pl.BlockSpec((C, C), const, pipeline_mode=resident),      # w_q (scaled)
            pl.BlockSpec((C, 2 * C), const, pipeline_mode=resident),  # w_kv
            pl.BlockSpec((C, C), const, pipeline_mode=resident),      # w_proj
            pl.BlockSpec((1, C), const, pipeline_mode=resident),      # b_proj
        ],
        out_specs=pl.BlockSpec((1, q_tile, C), lambda b, qi: (b, qi, 0)),
        scratch_shapes=[
            pltpu.VMEM((num_heads, N, Dh), compute_dtype),   # K, resident per batch
            pltpu.VMEM((num_heads, N, Dh), compute_dtype),   # V, resident per batch
        ],
        compiler_params=pltpu.CompilerParams(
            # Batch axis shards across TensorCores; the query-tile axis must be
            # "arbitrary" because the K/V scratch is carried across it.
            dimension_semantics=("parallel", "arbitrary")),
    )(x_c, x_c, w_q, w_kv, w_p, b_p)


def reference_attention(x, w_qkv, w_proj, b_proj, *, num_heads):
    """Pure-JAX reference mirroring the PyTorch forward."""
    B, N, C = x.shape
    Dh = C // num_heads
    scale = Dh ** (-0.5)
    qkv = x @ w_qkv                                         # (B, N, 3C)
    qkv = qkv.reshape(B, N, 3, num_heads, Dh).transpose(2, 0, 3, 1, 4)
    q, k, v = qkv[0], qkv[1], qkv[2]                        # (B, H, N, Dh)
    attn = (q @ jnp.swapaxes(k, -2, -1)) * scale            # (B, H, N, N)
    attn = jax.nn.softmax(attn, axis=-1)
    out = (attn @ v).transpose(0, 2, 1, 3).reshape(B, N, C)
    return out @ w_proj + b_proj[0]


if __name__ == "__main__":
    B, N, C = 2, 8, 32
    num_heads = 8

    key = jax.random.PRNGKey(0)
    kx, kw1, kw2, kb = jax.random.split(key, 4)

    x = jax.random.normal(kx, (B, N, C), dtype=jnp.float32)
    # nn.Linear(dim, 3*dim, bias=False) weight stored as (in, out) for x @ W.
    w_qkv = jax.random.normal(kw1, (C, 3 * C), dtype=jnp.float32) * (C ** -0.5)
    # nn.Linear(dim, dim) weight + bias, stored as (in, out) / (1, out).
    w_proj = jax.random.normal(kw2, (C, C), dtype=jnp.float32) * (C ** -0.5)
    b_proj = jax.random.normal(kb, (1, C), dtype=jnp.float32) * 0.1

    ref = reference_attention(x, w_qkv, w_proj, b_proj, num_heads=num_heads)

    # f32 compute path (tolerance covers the approx-reciprocal softmax normalize).
    out = vit_attention(x, w_qkv, w_proj, b_proj, num_heads=num_heads)
    out = jax.block_until_ready(out)
    assert out.shape == (B, N, C)
    assert jnp.allclose(out, ref, atol=1e-2, rtol=1e-2), "f32 mismatch vs reference"

    # bf16 MXU path (production setting: bf16 matmuls, f32 softmax / accumulation).
    out_bf16 = vit_attention(x, w_qkv, w_proj, b_proj, num_heads=num_heads,
                             compute_dtype=jnp.bfloat16)
    out_bf16 = jax.block_until_ready(out_bf16)
    assert out_bf16.shape == (B, N, C)
    assert jnp.allclose(out_bf16.astype(jnp.float32), ref,
                        atol=1.5e-1, rtol=1e-1), "bf16 mismatch vs reference"

    print("KERNEL_OK")
</pallas_src>

<mosaic_0001>
module attributes {stable_mosaic.version = 11 : i64} {
  func.func @attention_kernel(%arg0: i32, %arg1: i32, %arg2: memref<1x8x32xf32, #tpu.memory_space<vmem>>, %arg3: memref<1x8x32xf32, #tpu.memory_space<vmem>>, %arg4: memref<32x32xf32, #tpu.memory_space<vmem>>, %arg5: memref<32x64xf32, #tpu.memory_space<vmem>>, %arg6: memref<32x32xf32, #tpu.memory_space<vmem>>, %arg7: memref<1x32xf32, #tpu.memory_space<vmem>>, %arg8: memref<1x8x32xf32, #tpu.memory_space<vmem>>, %arg9: memref<8x8x4xf32, #tpu.memory_space<vmem>>, %arg10: memref<8x8x4xf32, #tpu.memory_space<vmem>>) attributes {dimension_semantics = [#tpu.dimension_semantics<parallel>, #tpu.dimension_semantics<arbitrary>], iteration_bounds = array<i64: 2, 1>, scalar_prefetch = 0 : i64, scratch_operands = 2 : i64, tpu.core_type = #tpu.core_type<tc>, window_params = [{transform_indices = @transform_0, window_bounds = array<i64: 1, 8, 32>}, {transform_indices = @transform_1, window_bounds = array<i64: 1, 8, 32>}, {pipeline_mode = #tpu.pipeline_mode<synchronous>, transform_indices = @transform_2, window_bounds = array<i64: 32, 32>}, {pipeline_mode = #tpu.pipeline_mode<synchronous>, transform_indices = @transform_3, window_bounds = array<i64: 32, 64>}, {pipeline_mode = #tpu.pipeline_mode<synchronous>, transform_indices = @transform_4, window_bounds = array<i64: 32, 32>}, {pipeline_mode = #tpu.pipeline_mode<synchronous>, transform_indices = @transform_5, window_bounds = array<i64: 1, 32>}, {transform_indices = @transform_6, window_bounds = array<i64: 1, 8, 32>}]} {
    %c0_i32 = arith.constant 0 : i32
    %0 = arith.cmpi eq, %arg1, %c0_i32 : i32
    %1 = arith.extui %0 : i1 to i32
    %c0_i32_0 = arith.constant 0 : i32
    %2 = arith.cmpi ne, %1, %c0_i32_0 : i32
    scf.if %2 {
      %c0_23 = arith.constant 0 : index
      %c0_24 = arith.constant 0 : index
      %c0_25 = arith.constant 0 : index
      %33 = vector.load %arg3[%c0_23, %c0_24, %c0_25] : memref<1x8x32xf32, #tpu.memory_space<vmem>>, vector<1x8x32xf32>
      %34 = vector.shape_cast %33 : vector<1x8x32xf32> to vector<8x32xf32>
      %c0_26 = arith.constant 0 : index
      %c0_27 = arith.constant 0 : index
      %35 = vector.load %arg5[%c0_26, %c0_27] : memref<32x64xf32, #tpu.memory_space<vmem>>, vector<32x64xf32>
      %cst_28 = arith.constant dense<0.000000e+00> : vector<8x64xf32>
      %36 = tpu.matmul %34, %35, %cst_28 {dimension_numbers = #tpu.dot_dimension_numbers<[1], [0], [0], [1], [0, 0, 1, 1], [], []>} : vector<8x32xf32>, vector<32x64xf32>, vector<8x64xf32> -> vector<8x64xf32>
      %37 = vector.extract_strided_slice %36 {offsets = [0, 0], sizes = [8, 32], strides = [1, 1]} : vector<8x64xf32> to vector<8x32xf32>
      %38 = vector.shape_cast %37 : vector<8x32xf32> to vector<8x8x4xf32>
      %39 = vector.extract_strided_slice %36 {offsets = [0, 32], sizes = [8, 32], strides = [1, 1]} : vector<8x64xf32> to vector<8x32xf32>
      %40 = vector.shape_cast %39 : vector<8x32xf32> to vector<8x8x4xf32>
      %41 = tpu.transpose %38, [1, 0, 2] : vector<8x8x4xf32> -> vector<8x8x4xf32>
      %c0_29 = arith.constant 0 : index
      %c0_30 = arith.constant 0 : index
      %c0_31 = arith.constant 0 : index
      %42 = vector.load %arg9[%c0_29, %c0_30, %c0_31] : memref<8x8x4xf32, #tpu.memory_space<vmem>>, vector<8x8x4xf32>
      tpu.vector_store %arg9[%c0_29, %c0_30, %c0_31], %41 {strides = array<i32>} : memref<8x8x4xf32, #tpu.memory_space<vmem>>, vector<8x8x4xf32>,
      %43 = tpu.transpose %40, [1, 0, 2] : vector<8x8x4xf32> -> vector<8x8x4xf32>
      %c0_32 = arith.constant 0 : index
      %c0_33 = arith.constant 0 : index
      %c0_34 = arith.constant 0 : index
      %44 = vector.load %arg10[%c0_32, %c0_33, %c0_34] : memref<8x8x4xf32, #tpu.memory_space<vmem>>, vector<8x8x4xf32>
      tpu.vector_store %arg10[%c0_32, %c0_33, %c0_34], %43 {strides = array<i32>} : memref<8x8x4xf32, #tpu.memory_space<vmem>>, vector<8x8x4xf32>,
    } else {
    }
    %c0 = arith.constant 0 : index
    %c0_1 = arith.constant 0 : index
    %c0_2 = arith.constant 0 : index
    %3 = vector.load %arg2[%c0, %c0_1, %c0_2] : memref<1x8x32xf32, #tpu.memory_space<vmem>>, vector<1x8x32xf32>
    %4 = vector.shape_cast %3 : vector<1x8x32xf32> to vector<8x32xf32>
    %c0_3 = arith.constant 0 : index
    %c0_4 = arith.constant 0 : index
    %5 = vector.load %arg4[%c0_3, %c0_4] : memref<32x32xf32, #tpu.memory_space<vmem>>, vector<32x32xf32>
    %cst = arith.constant dense<0.000000e+00> : vector<8x32xf32>
    %6 = tpu.matmul %4, %5, %cst {dimension_numbers = #tpu.dot_dimension_numbers<[1], [0], [0], [1], [0, 0, 1, 1], [], []>} : vector<8x32xf32>, vector<32x32xf32>, vector<8x32xf32> -> vector<8x32xf32>
    %7 = vector.shape_cast %6 : vector<8x32xf32> to vector<8x8x4xf32>
    %8 = tpu.transpose %7, [1, 0, 2] : vector<8x8x4xf32> -> vector<8x8x4xf32>
    %c0_5 = arith.constant 0 : index
    %c0_6 = arith.constant 0 : index
    %c0_7 = arith.constant 0 : index
    %9 = vector.load %arg9[%c0_5, %c0_6, %c0_7] : memref<8x8x4xf32, #tpu.memory_space<vmem>>, vector<8x8x4xf32>
    "tpu.trace_start"() <{level = 10 : i32, message = "hqd,hkd->hqk"}> : () -> ()
    %cst_8 = arith.constant dense<0.000000e+00> : vector<8x8x8xf32>
    %10 = tpu.matmul %8, %9, %cst_8 {dimension_numbers = #tpu.dot_dimension_numbers<[2], [2], [1], [1], [0, 0, 0, 1, 1, 1], [0], [0]>} : vector<8x8x4xf32>, vector<8x8x4xf32>, vector<8x8x8xf32> -> vector<8x8x8xf32>
    "tpu.trace_stop"() : () -> ()
    %cst_9 = arith.constant dense<0xFF800000> : vector<8x8xf32>
    %11 = vector.multi_reduction <maximumf>, %10, %cst_9 [2] : vector<8x8x8xf32> to vector<8x8xf32>
    %12 = vector.shape_cast %11 : vector<8x8xf32> to vector<8x8x1xf32>
    %13 = vector.broadcast %12 : vector<8x8x1xf32> to vector<8x8x8xf32>
    %14 = arith.subf %10, %13 : vector<8x8x8xf32>
    %15 = math.exp %14 : vector<8x8x8xf32>
    %cst_10 = arith.constant dense<0.000000e+00> : vector<8x8xf32>
    %16 = vector.multi_reduction <add>, %15, %cst_10 [2] : vector<8x8x8xf32> to vector<8x8xf32>
    %17 = vector.shape_cast %16 : vector<8x8xf32> to vector<8x8x1xf32>
    %c0_11 = arith.constant 0 : index
    %c0_12 = arith.constant 0 : index
    %c0_13 = arith.constant 0 : index
    %18 = vector.load %arg10[%c0_11, %c0_12, %c0_13] : memref<8x8x4xf32, #tpu.memory_space<vmem>>, vector<8x8x4xf32>
    "tpu.trace_start"() <{level = 10 : i32, message = "hqk,hkd->hqd"}> : () -> ()
    %cst_14 = arith.constant dense<0.000000e+00> : vector<8x8x4xf32>
    %19 = tpu.matmul %15, %18, %cst_14 {dimension_numbers = #tpu.dot_dimension_numbers<[2], [1], [1], [2], [0, 0, 0, 1, 1, 2], [0], [0]>} : vector<8x8x8xf32>, vector<8x8x4xf32>, vector<8x8x4xf32> -> vector<8x8x4xf32>
    "tpu.trace_stop"() : () -> ()
    %20 = tpu.reciprocal %17 {approx = true} : vector<8x8x1xf32> -> vector<8x8x1xf32>
    %21 = vector.broadcast %20 : vector<8x8x1xf32> to vector<8x8x4xf32>
    %22 = arith.mulf %19, %21 : vector<8x8x4xf32>
    %23 = tpu.transpose %22, [1, 0, 2] : vector<8x8x4xf32> -> vector<8x8x4xf32>
    %24 = vector.shape_cast %23 : vector<8x8x4xf32> to vector<8x32xf32>
    %c0_15 = arith.constant 0 : index
    %c0_16 = arith.constant 0 : index
    %25 = vector.load %arg6[%c0_15, %c0_16] : memref<32x32xf32, #tpu.memory_space<vmem>>, vector<32x32xf32>
    %cst_17 = arith.constant dense<0.000000e+00> : vector<8x32xf32>
    %26 = tpu.matmul %24, %25, %cst_17 {dimension_numbers = #tpu.dot_dimension_numbers<[1], [0], [0], [1], [0, 0, 1, 1], [], []>} : vector<8x32xf32>, vector<32x32xf32>, vector<8x32xf32> -> vector<8x32xf32>
    %c0_18 = arith.constant 0 : index
    %c0_19 = arith.constant 0 : index
    %27 = vector.load %arg7[%c0_18, %c0_19] : memref<1x32xf32, #tpu.memory_space<vmem>>, vector<1x32xf32>
    %28 = vector.broadcast %27 : vector<1x32xf32> to vector<8x32xf32>
    %29 = arith.addf %26, %28 : vector<8x32xf32>
    %c0_20 = arith.constant 0 : index
    %c0_21 = arith.constant 0 : index
    %c0_22 = arith.constant 0 : index
    %30 = vector.load %arg8[%c0_20, %c0_21, %c0_22] : memref<1x8x32xf32, #tpu.memory_space<vmem>>, vector<1x8x32xf32>
    %31 = vector.shape_cast %30 : vector<1x8x32xf32> to vector<8x32xf32>
    %32 = vector.shape_cast %29 : vector<8x32xf32> to vector<1x8x32xf32>
    tpu.vector_store %arg8[%c0_20, %c0_21, %c0_22], %32 {strides = array<i32>} : memref<1x8x32xf32, #tpu.memory_space<vmem>>, vector<1x8x32xf32>,
    return
  }
  func.func @transform_0(%arg0: i32, %arg1: i32) -> (i32, i32, i32) {
    %c0_i32 = arith.constant 0 : i32
    %c0_i32_0 = arith.constant 0 : i32
    return %arg0, %arg1, %c0_i32 : i32, i32, i32
  }
  func.func @transform_1(%arg0: i32, %arg1: i32) -> (i32, i32, i32) {
    %c0_i32 = arith.constant 0 : i32
    %c0_i32_0 = arith.constant 0 : i32
    %c0_i32_1 = arith.constant 0 : i32
    return %arg0, %c0_i32, %c0_i32_0 : i32, i32, i32
  }
  func.func @transform_2(%arg0: i32, %arg1: i32) -> (i32, i32) {
    %c0_i32 = arith.constant 0 : i32
    %c0_i32_0 = arith.constant 0 : i32
    %c0_i32_1 = arith.constant 0 : i32
    return %c0_i32, %c0_i32_0 : i32, i32
  }
  func.func @transform_3(%arg0: i32, %arg1: i32) -> (i32, i32) {
    %c0_i32 = arith.constant 0 : i32
    %c0_i32_0 = arith.constant 0 : i32
    %c0_i32_1 = arith.constant 0 : i32
    return %c0_i32, %c0_i32_0 : i32, i32
  }
  func.func @transform_4(%arg0: i32, %arg1: i32) -> (i32, i32) {
    %c0_i32 = arith.constant 0 : i32
    %c0_i32_0 = arith.constant 0 : i32
    %c0_i32_1 = arith.constant 0 : i32
    return %c0_i32, %c0_i32_0 : i32, i32
  }
  func.func @transform_5(%arg0: i32, %arg1: i32) -> (i32, i32) {
    %c0_i32 = arith.constant 0 : i32
    %c0_i32_0 = arith.constant 0 : i32
    %c0_i32_1 = arith.constant 0 : i32
    return %c0_i32, %c0_i32_0 : i32, i32
  }
  func.func @transform_6(%arg0: i32, %arg1: i32) -> (i32, i32, i32) {
    %c0_i32 = arith.constant 0 : i32
    %c0_i32_0 = arith.constant 0 : i32
    return %arg0, %arg1, %c0_i32 : i32, i32, i32
  }
}

</mosaic_0001>

<llo_original>
// kernel: tpu_custom_call.1
$region0: #{tpu_custom_call.1}
  #allocation0 [shape = 'u32[]', space=smem, size = 0x4, offset = 0x4, fixed_abs, tag = 'smem constant byte address 0x4 - core index']
  #allocation1 [shape = 'u32[72,128]{1,0:T(1,128)}', space=vmem, size = 0x9000, scoped, tag = 'internal scratch']
  #allocation2 [shape = 'f32[8,8,4]{2,1,0:T(8,128)}', space=vmem, size = 0x8000, scoped, tag = 'scratch operand']
  #allocation3 [shape = 'f32[8,8,4]{2,1,0:T(8,128)}', space=vmem, size = 0x8000, scoped, tag = 'scratch operand']
  %s0 = inlined_call_operand.hbm [shape: f32[2,8,32], index: 0, kind: input, shape index: {}]
  %s1 = inlined_call_operand.hbm [shape: f32[2,8,32], index: 1, kind: input, shape index: {}]
  %s2 = inlined_call_operand.hbm [shape: f32[32,32], index: 2, kind: input, shape index: {}]
  %s3 = inlined_call_operand.hbm [shape: f32[32,64], index: 3, kind: input, shape index: {}]
  %s4 = inlined_call_operand.hbm [shape: f32[32,32], index: 4, kind: input, shape index: {}]
  %s5 = inlined_call_operand.vmem [shape: f32[1,32], index: 5, kind: input, shape index: {}]
  %s6 = inlined_call_operand.hbm [shape: f32[2,8,32], index: 6, kind: output, shape index: {}]
  %s7 = sld [smem:[#allocation0]]
  $region81: #{tpu_custom_call.1} parent=0
    _
  %s9 = ssub.s32 1, %s7
  %s10 = scalar_select 0, %s9, %s7
  $region1: #{tpu_custom_call.1} parent=0
    #allocation4 [shape = 'u8[8192]{0}', space=vmem, size = 0x2000, scoped, tag = 'input window, operand 0']
    #allocation5 [shape = 's32[2]{0}', space=sflag, size = 0x8, scoped, tag = 'scoped memory for tpu_custom_call.1']
    #allocation6 [shape = 's32[2]{0}', space=sflag, size = 0x8, scoped, tag = 'scoped memory for tpu_custom_call.1']
    #allocation7 [shape = 'u8[8192]{0}', space=vmem, size = 0x2000, scoped, tag = 'input window, operand 1']
    #allocation8 [shape = 's32[2]{0}', space=sflag, size = 0x8, scoped, tag = 'scoped memory for tpu_custom_call.1']
    #allocation9 [shape = 'u8[16384]{0}', space=vmem, size = 0x4000, scoped, tag = 'input window, operand 2, single buffered']
    #allocation10 [shape = 'u8[16384]{0}', space=vmem, size = 0x4000, scoped, tag = 'input window, operand 3, single buffered']
    #allocation11 [shape = 's32[1]{0}', space=sflag, size = 0x4, scoped, tag = 'scoped memory for tpu_custom_call.1']
    #allocation12 [shape = 'u8[16384]{0}', space=vmem, size = 0x4000, scoped, tag = 'input window, operand 4, single buffered']
    #allocation13 [shape = 'u8[8192]{0}', space=vmem, size = 0x2000, scoped, tag = 'output window, operand 0']
    %11 = vsyncpa [#allocation5], 0
    %s12 = scalar_lea.sflag [#allocation5], 1
    %13 = vsyncpa %s12, 0
    %14 = vsyncpa [#allocation8], 0
    %s15 = scalar_lea.sflag [#allocation8], 1
    %16 = vsyncpa %s15, 0
    %17 = vsyncpa [#allocation11], 0
    %18 = vsyncpa [#allocation6], 0
    %s19 = scalar_lea.sflag [#allocation6], 1
    %20 = vsyncpa %s19, 0
    loop: start=0, step=1, limit=4
    $region2: #{tpu_custom_call.1} parent=1 // loop_pre_header
      _
    $region3: #{tpu_custom_call.1} parent=1 // loop_header
      %s22 = sphi 0, %s26
      %p23 = scmp.ge.s32.totalorder %s22, 4
      %s29 = sphi 0, %s41
      %s30 = sphi 0, %s37
      %s31 = sphi 0, %s29
      %s32 = sphi 0, %s30
      %s33 = sphi 0, %s31
      %s34 = sphi 0, %s32
      %s46 = sphi 0, %s48
      %s49 = sphi 0, %s46
      %s50 = sphi 0, %s49
      %s66 = sphi 0, %s50
      %s72 = sphi 0, %s74
      %s75 = sphi 0, %s72
      %s76 = sphi 0, %s75
      %s92 = sphi 0, %s76
      %s96 = sphi 0, %s96
      %s98 = sphi 0, %s96
      %s99 = sphi 0, %s98
      %s113 = sphi 0, %s99
      %s117 = sphi 0, %s117
      %s119 = sphi 0, %s117
      %s120 = sphi 0, %s119
      %s134 = sphi 0, %s120
      %s138 = sphi 0, %s138
      %s140 = sphi 0, %s138
      %s141 = sphi 0, %s140
      %s155 = sphi 0, %s141
      %s159 = sphi 0, %s159
      %s161 = sphi 0, %s159
      %s162 = sphi 0, %s161
      %s176 = sphi 0, %s162
      %s184 = sphi 0, %s186
      %s187 = sphi 0, %s184
      %s188 = sphi 0, %s187
      %s204 = sphi 0, %s188
    $region4: #{tpu_custom_call.1} parent=1 // loop_header_branch
      %25 = sbr.rel (%p23) target = $region8
    $region5: #{tpu_custom_call.1} parent=1 // loop_body
      %s27 = ssub.s32 %s22, 1
      %s28 = ssub.s32 %s22, 2
      %s35 = sadd.s32 1, %s30
      %p36 = scmp.ge.s32.totalorder %s35, 1
      %s37 = scalar_select %p36, 0, %s35
      %s38 = sadd.s32 1, %s29
      %s39 = scalar_select %p36, %s38, %s29
      %p40 = scmp.ge.s32.totalorder %s39, 2
      %s41 = scalar_select %p40, 0, %s39
      %s42 = ssub.s32 %s29, %s41
      %s43 = ssub.s32 %s30, %s37
      %s44 = sor.u32 %s42, %s43
      %p45 = scmp.eq.s32.totalorder %s44, 0
      %s47 = sadd.s32 %s46, 1
      %s48 = scalar_select %p45, %s46, %s47
      %p51 = pneg %p45
      %p52 = scmp.eq.s32.totalorder %s22, 1
      %p53 = por %p51, %p52
      %p54 = scmp.ne.s32.totalorder %s46, %s49
      %p55 = scmp.eq.s32.totalorder %s22, 0
      %p56 = por %p54, %p55
      %p57 = scmp.ne.s32.totalorder %s46, %s49
      %p58 = scmp.eq.s32.totalorder %s27, 1
      %p59 = por %p57, %p58
      %p60 = scmp.ne.s32.totalorder %s49, %s50
      %p61 = scmp.eq.s32.totalorder %s27, 0
      %p62 = por %p60, %p61
      %p63 = scmp.ne.s32.totalorder %s49, %s50
      %p64 = scmp.eq.s32.totalorder %s28, 1
      %p65 = por %p63, %p64
      %p67 = scmp.ne.s32.totalorder %s50, %s66
      %p68 = scmp.eq.s32.totalorder %s28, 0
      %p69 = por %p67, %p68
      %s70 = ssub.s32 %s29, %s41
      %p71 = scmp.eq.s32.totalorder %s70, 0
      %s73 = sadd.s32 %s72, 1
      %s74 = scalar_select %p71, %s72, %s73
      %p77 = pneg %p71
      %p78 = scmp.eq.s32.totalorder %s22, 1
      %p79 = por %p77, %p78
      %p80 = scmp.ne.s32.totalorder %s72, %s75
      %p81 = scmp.eq.s32.totalorder %s22, 0
      %p82 = por %p80, %p81
      %p83 = scmp.ne.s32.totalorder %s72, %s75
      %p84 = scmp.eq.s32.totalorder %s27, 1
      %p85 = por %p83, %p84
      %p86 = scmp.ne.s32.totalorder %s75, %s76
      %p87 = scmp.eq.s32.totalorder %s27, 0
      %p88 = por %p86, %p87
      %p89 = scmp.ne.s32.totalorder %s75, %s76
      %p90 = scmp.eq.s32.totalorder %s28, 1
      %p91 = por %p89, %p90
      %p93 = scmp.ne.s32.totalorder %s76, %s92
      %p94 = scmp.eq.s32.totalorder %s28, 0
      %p95 = por %p93, %p94
      %s97 = sadd.s32 %s96, 1
      %p100 = scmp.eq.s32.totalorder %s22, 1
      %p101 = scmp.ne.s32.totalorder %s96, %s98
      %p102 = scmp.eq.s32.totalorder %s22, 0
      %p103 = por %p101, %p102
      %p104 = scmp.ne.s32.totalorder %s96, %s98
      %p105 = scmp.eq.s32.totalorder %s27, 1
      %p106 = por %p104, %p105
      %p107 = scmp.ne.s32.totalorder %s98, %s99
      %p108 = scmp.eq.s32.totalorder %s27, 0
      %p109 = por %p107, %p108
      %p110 = scmp.ne.s32.totalorder %s98, %s99
      %p111 = scmp.eq.s32.totalorder %s28, 1
      %p112 = por %p110, %p111
      %p114 = scmp.ne.s32.totalorder %s99, %s113
      %p115 = scmp.eq.s32.totalorder %s28, 0
      %p116 = por %p114, %p115
      %s118 = sadd.s32 %s117, 1
      %p121 = scmp.eq.s32.totalorder %s22, 1
      %p122 = scmp.ne.s32.totalorder %s117, %s119
      %p123 = scmp.eq.s32.totalorder %s22, 0
      %p124 = por %p122, %p123
      %p125 = scmp.ne.s32.totalorder %s117, %s119
      %p126 = scmp.eq.s32.totalorder %s27, 1
      %p127 = por %p125, %p126
      %p128 = scmp.ne.s32.totalorder %s119, %s120
      %p129 = scmp.eq.s32.totalorder %s27, 0
      %p130 = por %p128, %p129
      %p131 = scmp.ne.s32.totalorder %s119, %s120
      %p132 = scmp.eq.s32.totalorder %s28, 1
      %p133 = por %p131, %p132
      %p135 = scmp.ne.s32.totalorder %s120, %s134
      %p136 = scmp.eq.s32.totalorder %s28, 0
      %p137 = por %p135, %p136
      %s139 = sadd.s32 %s138, 1
      %p142 = scmp.eq.s32.totalorder %s22, 1
      %p143 = scmp.ne.s32.totalorder %s138, %s140
      %p144 = scmp.eq.s32.totalorder %s22, 0
      %p145 = por %p143, %p144
      %p146 = scmp.ne.s32.totalorder %s138, %s140
      %p147 = scmp.eq.s32.totalorder %s27, 1
      %p148 = por %p146, %p147
      %p149 = scmp.ne.s32.totalorder %s140, %s141
      %p150 = scmp.eq.s32.totalorder %s27, 0
      %p151 = por %p149, %p150
      %p152 = scmp.ne.s32.totalorder %s140, %s141
      %p153 = scmp.eq.s32.totalorder %s28, 1
      %p154 = por %p152, %p153
      %p156 = scmp.ne.s32.totalorder %s141, %s155
      %p157 = scmp.eq.s32.totalorder %s28, 0
      %p158 = por %p156, %p157
      %s160 = sadd.s32 %s159, 1
      %p163 = scmp.eq.s32.totalorder %s22, 1
      %p164 = scmp.ne.s32.totalorder %s159, %s161
      %p165 = scmp.eq.s32.totalorder %s22, 0
      %p166 = por %p164, %p165
      %p167 = scmp.ne.s32.totalorder %s159, %s161
      %p168 = scmp.eq.s32.totalorder %s27, 1
      %p169 = por %p167, %p168
      %p170 = scmp.ne.s32.totalorder %s161, %s162
      %p171 = scmp.eq.s32.totalorder %s27, 0
      %p172 = por %p170, %p171
      %p173 = scmp.ne.s32.totalorder %s161, %s162
      %p174 = scmp.eq.s32.totalorder %s28, 1
      %p175 = por %p173, %p174
      %p177 = scmp.ne.s32.totalorder %s162, %s176
      %p178 = scmp.eq.s32.totalorder %s28, 0
      %p179 = por %p177, %p178
      %s180 = ssub.s32 %s29, %s41
      %s181 = ssub.s32 %s30, %s37
      %s182 = sor.u32 %s180, %s181
      %p183 = scmp.eq.s32.totalorder %s182, 0
      %s185 = sadd.s32 %s184, 1
      %s186 = scalar_select %p183, %s184, %s185
      %p189 = pneg %p183
      %p190 = scmp.eq.s32.totalorder %s22, 1
      %p191 = por %p189, %p190
      %p192 = scmp.ne.s32.totalorder %s184, %s187
      %p193 = scmp.eq.s32.totalorder %s22, 0
      %p194 = por %p192, %p193
      %p195 = scmp.ne.s32.totalorder %s184, %s187
      %p196 = scmp.eq.s32.totalorder %s27, 1
      %p197 = por %p195, %p196
      %p198 = scmp.ne.s32.totalorder %s187, %s188
      %p199 = scmp.eq.s32.totalorder %s27, 0
      %p200 = por %p198, %p199
      %p201 = scmp.ne.s32.totalorder %s187, %s188
      %p202 = scmp.eq.s32.totalorder %s28, 1
      %p203 = por %p201, %p202
      %p205 = scmp.ne.s32.totalorder %s188, %s204
      %p206 = scmp.eq.s32.totalorder %s28, 0
      %p207 = por %p205, %p206
      %p208 = scmp.le.s32.totalorder 1, %s22
      %p209 = scmp.lt.s32.totalorder %s22, 3
      %p210 = pnand %p208, %p209
      %p211 = pneg %p210
      // Predicated region
      $region9: #{tpu_custom_call.1} parent=5 // pred_check
        _
      $region10: #{tpu_custom_call.1} parent=5 // pred_check_branch
        %213 = sbr.rel (%p210) target = $region12
      $region11: #{tpu_custom_call.1} parent=5 // pred_region
        %s214 = ssub.s32 %s22, 1
        // Predicated region
        $region13: #{tpu_custom_call.1} parent=11 // pred_check
          %p215 = pneg %p109
        $region14: #{tpu_custom_call.1} parent=11 // pred_check_branch
          %217 = sbr.rel (%p215) target = $region16
        $region15: #{tpu_custom_call.1} parent=11 // pred_region
          %219 = vsyncadd [#allocation8], 0
          %s220 = sshll.u32 %s2, 4
          %s221 = int_to_ptr.hbm [resolvable:$true] %s220
          %s222 = sshll.u32 [#allocation9], 4
          %s223 = int_to_ptr.vmem [resolvable:$true] %s222
          %228 = dma.hbm_to_vmem [thread:$0]  %s221, 512, %s223, [#allocation8], 128, 128, 8
        $region16: #{tpu_custom_call.1} parent=11 // pred_fallthru
          _
        // Predicated region
        $region17: #{tpu_custom_call.1} parent=11 // pred_check
          %p229 = pneg %p130
        $region18: #{tpu_custom_call.1} parent=11 // pred_check_branch
          %231 = sbr.rel (%p229) target = $region20
        $region19: #{tpu_custom_call.1} parent=11 // pred_region
          %233 = vsyncadd [#allocation11], 0
          %s234 = sshll.u32 %s3, 4
          %s235 = int_to_ptr.hbm [resolvable:$true] %s234
          %s236 = sshll.u32 [#allocation10], 4
          %s237 = int_to_ptr.vmem [resolvable:$true] %s236
          %242 = dma.hbm_to_vmem [thread:$0]  %s235, 512, %s237, [#allocation11], 128, 128, 8
        $region20: #{tpu_custom_call.1} parent=11 // pred_fallthru
          _
        // Predicated region
        $region21: #{tpu_custom_call.1} parent=11 // pred_check
          %p243 = pneg %p151
        $region22: #{tpu_custom_call.1} parent=11 // pred_check_branch
          %245 = sbr.rel (%p243) target = $region24
        $region23: #{tpu_custom_call.1} parent=11 // pred_region
          %247 = vsyncadd [#allocation11], 0
          %s248 = sshll.u32 %s4, 4
          %s249 = int_to_ptr.hbm [resolvable:$true] %s248
          %s250 = sshll.u32 [#allocation12], 4
          %s251 = int_to_ptr.vmem [resolvable:$true] %s250
          %256 = dma.hbm_to_vmem [thread:$0]  %s249, 512, %s251, [#allocation11], 128, 128, 8
        $region24: #{tpu_custom_call.1} parent=11 // pred_fallthru
          _
        // Predicated region
        $region25: #{tpu_custom_call.1} parent=11 // pred_check
          %p257 = pneg %p172
        $region26: #{tpu_custom_call.1} parent=11 // pred_check_branch
          %259 = sbr.rel (%p257) target = $region28
        $region27: #{tpu_custom_call.1} parent=11 // pred_region
          _
        $region28: #{tpu_custom_call.1} parent=11 // pred_fallthru
          _
      $region12: #{tpu_custom_call.1} parent=5 // pred_fallthru
        _
      %p260 = scmp.lt.s32.totalorder %s22, 2
      // Predicated region
      $region29: #{tpu_custom_call.1} parent=5 // pred_check
        %p261 = pneg %p260
      $region30: #{tpu_custom_call.1} parent=5 // pred_check_branch
        %263 = sbr.rel (%p261) target = $region32
      $region31: #{tpu_custom_call.1} parent=5 // pred_region
        // Predicated region
        $region33: #{tpu_custom_call.1} parent=31 // pred_check
          %p264 = pneg %p56
        $region34: #{tpu_custom_call.1} parent=31 // pred_check_branch
          %266 = sbr.rel (%p264) target = $region36
        $region35: #{tpu_custom_call.1} parent=31 // pred_region
          %s267 = sand.u32 %s46, 1
          %s268 = scalar_lea.sflag [#allocation5], %s267
          %s269 = sand.u32 %s46, 1
          %s270 = smul.addr %s269, 8
          %s271 = scalar_lea.vmem [#allocation4], %s270
          %273 = vsyncadd %s268, 0
          %s274 = sadd.s32 %s30, %s29
          %s275 = smul.addr %s274, 8
          %s276 = scalar_lea.hbm %s0, %s275
          %s278 = sshll.u32 %s276, 4
          %s279 = int_to_ptr.hbm [resolvable:$true] %s278
          %s280 = sshll.u32 %s271, 4
          %s281 = int_to_ptr.vmem [resolvable:$true] %s280
          %283 = dma.hbm_to_vmem [thread:$0]  %s279, 128, %s281, %s268
        $region36: #{tpu_custom_call.1} parent=31 // pred_fallthru
          _
        // Predicated region
        $region37: #{tpu_custom_call.1} parent=31 // pred_check
          %p284 = pneg %p82
        $region38: #{tpu_custom_call.1} parent=31 // pred_check_branch
          %286 = sbr.rel (%p284) target = $region40
        $region39: #{tpu_custom_call.1} parent=31 // pred_region
          %s287 = sand.u32 %s22, 1
          %s288 = scalar_lea.sflag [#allocation8], %s287
          %s289 = sand.u32 %s72, 1
          %s290 = smul.addr %s289, 8
          %s291 = scalar_lea.vmem [#allocation7], %s290
          %293 = vsyncadd %s288, 0
          %s294 = smul.addr %s29, 8
          %s295 = scalar_lea.hbm %s1, %s294
          %s297 = sshll.u32 %s295, 4
          %s298 = int_to_ptr.hbm [resolvable:$true] %s297
          %s299 = sshll.u32 %s291, 4
          %s300 = int_to_ptr.vmem [resolvable:$true] %s299
          %302 = dma.hbm_to_vmem [thread:$0]  %s298, 128, %s300, %s288
        $region40: #{tpu_custom_call.1} parent=31 // pred_fallthru
          _
      $region32: #{tpu_custom_call.1} parent=5 // pred_fallthru
        _
      %p303 = scmp.le.s32.totalorder 1, %s22
      %p304 = scmp.lt.s32.totalorder %s22, 3
      %p305 = pnand %p303, %p304
      %p306 = pneg %p305
      // Predicated region
      $region41: #{tpu_custom_call.1} parent=5 // pred_check
        _
      $region42: #{tpu_custom_call.1} parent=5 // pred_check_branch
        %308 = sbr.rel (%p305) target = $region44
      $region43: #{tpu_custom_call.1} parent=5 // pred_region
        %s309 = ssub.s32 %s22, 1
        %s310 = sand.u32 %s49, 1
        %s311 = scalar_lea.sflag [#allocation5], %s310
        %s312 = sand.u32 %s49, 1
        %s313 = smul.addr %s312, 8
        %s314 = scalar_lea.vmem [#allocation4], %s313
        // Predicated region
        $region45: #{tpu_custom_call.1} parent=43 // pred_check
          %p315 = pneg %p62
        $region46: #{tpu_custom_call.1} parent=43 // pred_check_branch
          %317 = sbr.rel (%p315) target = $region48
        $region47: #{tpu_custom_call.1} parent=43 // pred_region
          %319 = dma.done %s311, 128
        $region48: #{tpu_custom_call.1} parent=43 // pred_fallthru
          _
        %s320 = sand.u32 %s27, 1
        %s321 = scalar_lea.sflag [#allocation8], %s320
        %s322 = sand.u32 %s75, 1
        %s323 = smul.addr %s322, 8
        %s324 = scalar_lea.vmem [#allocation7], %s323
        // Predicated region
        $region49: #{tpu_custom_call.1} parent=43 // pred_check
          %p325 = pneg %p88
        $region50: #{tpu_custom_call.1} parent=43 // pred_check_branch
          %327 = sbr.rel (%p325) target = $region52
        $region51: #{tpu_custom_call.1} parent=43 // pred_region
          %329 = dma.done %s321, 128
        $region52: #{tpu_custom_call.1} parent=43 // pred_fallthru
          _
        // Predicated region
        $region53: #{tpu_custom_call.1} parent=43 // pred_check
          %p330 = pneg %p109
        $region54: #{tpu_custom_call.1} parent=43 // pred_check_branch
          %332 = sbr.rel (%p330) target = $region56
        $region55: #{tpu_custom_call.1} parent=43 // pred_region
          %334 = dma.done [#allocation8], 512
        $region56: #{tpu_custom_call.1} parent=43 // pred_fallthru
          _
        // Predicated region
        $region57: #{tpu_custom_call.1} parent=43 // pred_check
          %p335 = pneg %p130
        $region58: #{tpu_custom_call.1} parent=43 // pred_check_branch
          %337 = sbr.rel (%p335) target = $region60
        $region59: #{tpu_custom_call.1} parent=43 // pred_region
          %339 = dma.done [#allocation11], 512
        $region60: #{tpu_custom_call.1} parent=43 // pred_fallthru
          _
        // Predicated region
        $region61: #{tpu_custom_call.1} parent=43 // pred_check
          %p340 = pneg %p151
        $region62: #{tpu_custom_call.1} parent=43 // pred_check_branch
          %342 = sbr.rel (%p340) target = $region64
        $region63: #{tpu_custom_call.1} parent=43 // pred_region
          %344 = dma.done [#allocation11], 512
        $region64: #{tpu_custom_call.1} parent=43 // pred_fallthru
          _
        %s345 = sand.u32 %s49, 1
        %s346 = scalar_lea.sflag [#allocation5], %s345
        %s347 = sand.u32 %s49, 1
        %s348 = smul.addr %s347, 8
        %s349 = scalar_lea.vmem [#allocation4], %s348
        %p350 = pneg %p62
        %p351 = pneg %p59
        %s352 = sand.u32 %s27, 1
        %s353 = scalar_lea.sflag [#allocation8], %s352
        %s354 = sand.u32 %s75, 1
        %s355 = smul.addr %s354, 8
        %s356 = scalar_lea.vmem [#allocation7], %s355
        %p357 = pneg %p88
        %p358 = pneg %p85
        %p359 = pneg %p109
        %p360 = pneg %p106
        %p361 = pneg %p130
        %p362 = pneg %p127
        %p363 = pneg %p151
        %p364 = pneg %p148
        %p365 = pneg %p172
        %p366 = pneg %p169
        %p367 = pneg %p200
        %p368 = pneg %p197
        %s369 = sand.u32 %s187, 1
        %s370 = scalar_lea.sflag [#allocation6], %s369
        %s371 = sand.u32 %s187, 1
        %s372 = smul.addr %s371, 8
        %s373 = scalar_lea.vmem [#allocation13], %s372
        %p374 = scmp.eq.s32.totalorder %s32, 0
        // Predicated region
        $region65: #{tpu_custom_call.1} parent=43 // pred_check
          %p375 = pneg %p374
        $region66: #{tpu_custom_call.1} parent=43 // pred_check_branch
          %377 = sbr.rel (%p375) target = $region68
        $region67: #{tpu_custom_call.1} parent=43 // pred_region
          %v378 = vld [vmem:[%s324] sm:$0xff]
          %v379 = vld [vmem:[#allocation10] sm:$0xff]
          %v380 = vld [vmem:[#allocation10 + $0x8] sm:$0xff]
          %v381 = vld [vmem:[#allocation10 + $0x10] sm:$0xff]
          %v382 = vld [vmem:[#allocation10 + $0x18] sm:$0xff]
          %vm383 = vcmask 261120
          %v385 = vsel %vm383, %v378, 0
          %387 = vmatpush.msra.mxu0 0.0
          %388 = vmatpush.msra.mxu0 0.0
          %389 = vmatpush.msra.mxu0 0.0
          %390 = vmatpush.msra.mxu0 0.0
          %391 = vmatpush.msra.mxu0 0.0
          %392 = vmatpush.msra.mxu0 0.0
          %393 = vmatpush.msra.mxu0 0.0
          %394 = vmatpush.msra.mxu0 0.0
          %395 = vmatpush.msra.mxu0 0.0
          %396 = vmatpush.msra.mxu0 0.0
          %397 = vmatpush.msra.mxu0 0.0
          %398 = vmatpush.msra.mxu0 0.0
          %399 = vmatpush.msra.mxu0 %v382
          %400 = vmatpush.msra.mxu0 %v381
          %401 = vmatpush.msra.mxu0 %v380
          %402 = vmatpush.msra.mxu0 %v379
          %403 = vmatmul.f32.gmra.mxu0 %v385
          %v404 = vpop.f32.mrf.mxu0
          %v405 = vadd.f32 0.0, %v404
          %406 = vdwg.mxu0
          %408 = vrot.lane.b32.xlu0 %v405, 124
          %v409 = vpop.permute.xlu0 %408
          %411 = vrot.lane.b32.xlu0 %v405, 120
          %v412 = vpop.permute.xlu0 %411
          %414 = vrot.lane.b32.xlu0 %v405, 116
          %v415 = vpop.permute.xlu0 %414
          %417 = vrot.lane.b32.xlu0 %v405, 112
          %v418 = vpop.permute.xlu0 %417
          %420 = vrot.lane.b32.xlu0 %v405, 108
          %v421 = vpop.permute.xlu0 %420
          %423 = vrot.lane.b32.xlu0 %v405, 104
          %v424 = vpop.permute.xlu0 %423
          %426 = vrot.lane.b32.xlu0 %v405, 100
          %v427 = vpop.permute.xlu0 %426
          %v429 = vrot.slane %v412, 4
          %vm430 = vcmask 1047556
          %v431 = vsel %vm430, %v429, %v405
          %v432 = vrot.slane %v405, 4
          %v433 = vsel %vm430, %v412, %v432
          %v435 = vunpack.c.l.s4 1983009808
          %v436 = vunpack.c.0.s8 %v435
          %v437 = vperm.slane %v431, %v436
          %v439 = vunpack.c.l.s4 1983009808
          %v440 = vunpack.c.0.s8 %v439
          %v441 = vperm.slane %v433, %v440
          %v442 = vrot.slane %v415, 4
          %v443 = vsel %vm430, %v442, %v409
          %v444 = vrot.slane %v409, 4
          %v445 = vsel %vm430, %v415, %v444
          %v447 = vunpack.c.l.s4 1983009808
          %v448 = vunpack.c.0.s8 %v447
          %v449 = vperm.slane %v443, %v448
          %v451 = vunpack.c.l.s4 1983009808
          %v452 = vunpack.c.0.s8 %v451
          %v453 = vperm.slane %v445, %v452
          %v454 = vrot.slane %v424, 4
          %v455 = vsel %vm430, %v454, %v418
          %v456 = vrot.slane %v418, 4
          %v457 = vsel %vm430, %v424, %v456
          %v459 = vunpack.c.l.s4 1983009808
          %v460 = vunpack.c.0.s8 %v459
          %v461 = vperm.slane %v455, %v460
          %v463 = vunpack.c.l.s4 1983009808
          %v464 = vunpack.c.0.s8 %v463
          %v465 = vperm.slane %v457, %v464
          %v466 = vrot.slane %v427, 4
          %v467 = vsel %vm430, %v466, %v421
          %v468 = vrot.slane %v421, 4
          %v469 = vsel %vm430, %v427, %v468
          %v471 = vunpack.c.l.s4 1983009808
          %v472 = vunpack.c.0.s8 %v471
          %v473 = vperm.slane %v467, %v472
          %v475 = vunpack.c.l.s4 1983009808
          %v476 = vunpack.c.0.s8 %v475
          %v477 = vperm.slane %v469, %v476
          %v478 = vrot.slane %v449, 4
          %v479 = vsel %vm430, %v478, %v437
          %v480 = vrot.slane %v437, 4
          %v481 = vsel %vm430, %v449, %v480
          %v483 = vunpack.c.l.s4 1934713408
          %v484 = vunpack.c.0.s8 %v483
          %v485 = vperm.slane %v479, %v484
          %v487 = vunpack.c.l.s4 1934713408
          %v488 = vunpack.c.0.s8 %v487
          %v489 = vperm.slane %v481, %v488
          %v490 = vrot.slane %v453, 4
          %v491 = vsel %vm430, %v490, %v441
          %v492 = vrot.slane %v441, 4
          %v493 = vsel %vm430, %v453, %v492
          %v495 = vunpack.c.l.s4 1934713408
          %v496 = vunpack.c.0.s8 %v495
          %v497 = vperm.slane %v491, %v496
          %v499 = vunpack.c.l.s4 1934713408
          %v500 = vunpack.c.0.s8 %v499
          %v501 = vperm.slane %v493, %v500
          %v502 = vrot.slane %v473, 4
          %v503 = vsel %vm430, %v502, %v461
          %v504 = vrot.slane %v461, 4
          %v505 = vsel %vm430, %v473, %v504
          %v507 = vunpack.c.l.s4 1934713408
          %v508 = vunpack.c.0.s8 %v507
          %v509 = vperm.slane %v503, %v508
          %v511 = vunpack.c.l.s4 1934713408
          %v512 = vunpack.c.0.s8 %v511
          %v513 = vperm.slane %v505, %v512
          %v514 = vrot.slane %v477, 4
          %v515 = vsel %vm430, %v514, %v465
          %v516 = vrot.slane %v465, 4
          %v517 = vsel %vm430, %v477, %v516
          %v519 = vunpack.c.l.s4 1934713408
          %v520 = vunpack.c.0.s8 %v519
          %v521 = vperm.slane %v515, %v520
          %v523 = vunpack.c.l.s4 1934713408
          %v524 = vunpack.c.0.s8 %v523
          %v525 = vperm.slane %v517, %v524
          %v526 = vrot.slane %v509, 4
          %v527 = vsel %vm430, %v526, %v485
          %v528 = vrot.slane %v485, 4
          %v529 = vsel %vm430, %v509, %v528
          %v530 = vrot.slane %v513, 4
          %v531 = vsel %vm430, %v530, %v489
          %v532 = vrot.slane %v489, 4
          %v533 = vsel %vm430, %v513, %v532
          %v534 = vrot.slane %v521, 4
          %v535 = vsel %vm430, %v534, %v497
          %v536 = vrot.slane %v497, 4
          %v537 = vsel %vm430, %v521, %v536
          %v538 = vrot.slane %v525, 4
          %v539 = vsel %vm430, %v538, %v501
          %v540 = vrot.slane %v501, 4
          %v541 = vsel %vm430, %v525, %v540
          %542 = vrot.lane.b32.xlu0 %v405, 96
          %v543 = vpop.permute.xlu0 %542
          %544 = vrot.lane.b32.xlu0 %v409, 96
          %v545 = vpop.permute.xlu0 %544
          %546 = vrot.lane.b32.xlu0 %v412, 96
          %v547 = vpop.permute.xlu0 %546
          %548 = vrot.lane.b32.xlu0 %v415, 96
          %v549 = vpop.permute.xlu0 %548
          %550 = vrot.lane.b32.xlu0 %v418, 96
          %v551 = vpop.permute.xlu0 %550
          %552 = vrot.lane.b32.xlu0 %v421, 96
          %v553 = vpop.permute.xlu0 %552
          %554 = vrot.lane.b32.xlu0 %v424, 96
          %v555 = vpop.permute.xlu0 %554
          %556 = vrot.lane.b32.xlu0 %v427, 96
          %v557 = vpop.permute.xlu0 %556
          %v566 = vrot.slane %v547, 4
          %v567 = vsel %vm430, %v566, %v543
          %v568 = vrot.slane %v543, 4
          %v569 = vsel %vm430, %v547, %v568
          %v571 = vunpack.c.l.s4 1983009808
          %v572 = vunpack.c.0.s8 %v571
          %v573 = vperm.slane %v567, %v572
          %v575 = vunpack.c.l.s4 1983009808
          %v576 = vunpack.c.0.s8 %v575
          %v577 = vperm.slane %v569, %v576
          %v578 = vrot.slane %v549, 4
          %v579 = vsel %vm430, %v578, %v545
          %v580 = vrot.slane %v545, 4
          %v581 = vsel %vm430, %v549, %v580
          %v583 = vunpack.c.l.s4 1983009808
          %v584 = vunpack.c.0.s8 %v583
          %v585 = vperm.slane %v579, %v584
          %v587 = vunpack.c.l.s4 1983009808
          %v588 = vunpack.c.0.s8 %v587
          %v589 = vperm.slane %v581, %v588
          %v590 = vrot.slane %v555, 4
          %v591 = vsel %vm430, %v590, %v551
          %v592 = vrot.slane %v551, 4
          %v593 = vsel %vm430, %v555, %v592
          %v595 = vunpack.c.l.s4 1983009808
          %v596 = vunpack.c.0.s8 %v595
          %v597 = vperm.slane %v591, %v596
          %v599 = vunpack.c.l.s4 1983009808
          %v600 = vunpack.c.0.s8 %v599
          %v601 = vperm.slane %v593, %v600
          %v602 = vrot.slane %v557, 4
          %v603 = vsel %vm430, %v602, %v553
          %v604 = vrot.slane %v553, 4
          %v605 = vsel %vm430, %v557, %v604
          %v607 = vunpack.c.l.s4 1983009808
          %v608 = vunpack.c.0.s8 %v607
          %v609 = vperm.slane %v603, %v608
          %v611 = vunpack.c.l.s4 1983009808
          %v612 = vunpack.c.0.s8 %v611
          %v613 = vperm.slane %v605, %v612
          %v614 = vrot.slane %v585, 4
          %v615 = vsel %vm430, %v614, %v573
          %v616 = vrot.slane %v573, 4
          %v617 = vsel %vm430, %v585, %v616
          %v619 = vunpack.c.l.s4 1934713408
          %v620 = vunpack.c.0.s8 %v619
          %v621 = vperm.slane %v615, %v620
          %v623 = vunpack.c.l.s4 1934713408
          %v624 = vunpack.c.0.s8 %v623
          %v625 = vperm.slane %v617, %v624
          %v626 = vrot.slane %v589, 4
          %v627 = vsel %vm430, %v626, %v577
          %v628 = vrot.slane %v577, 4
          %v629 = vsel %vm430, %v589, %v628
          %v631 = vunpack.c.l.s4 1934713408
          %v632 = vunpack.c.0.s8 %v631
          %v633 = vperm.slane %v627, %v632
          %v635 = vunpack.c.l.s4 1934713408
          %v636 = vunpack.c.0.s8 %v635
          %v637 = vperm.slane %v629, %v636
          %v638 = vrot.slane %v609, 4
          %v639 = vsel %vm430, %v638, %v597
          %v640 = vrot.slane %v597, 4
          %v641 = vsel %vm430, %v609, %v640
          %v643 = vunpack.c.l.s4 1934713408
          %v644 = vunpack.c.0.s8 %v643
          %v645 = vperm.slane %v639, %v644
          %v647 = vunpack.c.l.s4 1934713408
          %v648 = vunpack.c.0.s8 %v647
          %v649 = vperm.slane %v641, %v648
          %v650 = vrot.slane %v613, 4
          %v651 = vsel %vm430, %v650, %v601
          %v652 = vrot.slane %v601, 4
          %v653 = vsel %vm430, %v613, %v652
          %v655 = vunpack.c.l.s4 1934713408
          %v656 = vunpack.c.0.s8 %v655
          %v657 = vperm.slane %v651, %v656
          %v659 = vunpack.c.l.s4 1934713408
          %v660 = vunpack.c.0.s8 %v659
          %v661 = vperm.slane %v653, %v660
          %v662 = vrot.slane %v645, 4
          %v663 = vsel %vm430, %v662, %v621
          %v664 = vrot.slane %v621, 4
          %v665 = vsel %vm430, %v645, %v664
          %v666 = vrot.slane %v649, 4
          %v667 = vsel %vm430, %v666, %v625
          %v668 = vrot.slane %v625, 4
          %v669 = vsel %vm430, %v649, %v668
          %v670 = vrot.slane %v657, 4
          %v671 = vsel %vm430, %v670, %v633
          %v672 = vrot.slane %v633, 4
          %v673 = vsel %vm430, %v657, %v672
          %v674 = vrot.slane %v661, 4
          %v675 = vsel %vm430, %v674, %v637
          %v676 = vrot.slane %v637, 4
          %v677 = vsel %vm430, %v661, %v676
          %v678 = vrot.slane %v531, 4
          %v679 = vsel %vm430, %v678, %v527
          %v680 = vrot.slane %v527, 4
          %v681 = vsel %vm430, %v531, %v680
          %v683 = vunpack.c.l.s4 1983009808
          %v684 = vunpack.c.0.s8 %v683
          %v685 = vperm.slane %v679, %v684
          %v687 = vunpack.c.l.s4 1983009808
          %v688 = vunpack.c.0.s8 %v687
          %v689 = vperm.slane %v681, %v688
          %v690 = vrot.slane %v533, 4
          %v691 = vsel %vm430, %v690, %v529
          %v692 = vrot.slane %v529, 4
          %v693 = vsel %vm430, %v533, %v692
          %v695 = vunpack.c.l.s4 1983009808
          %v696 = vunpack.c.0.s8 %v695
          %v697 = vperm.slane %v691, %v696
          %v699 = vunpack.c.l.s4 1983009808
          %v700 = vunpack.c.0.s8 %v699
          %v701 = vperm.slane %v693, %v700
          %v702 = vrot.slane %v539, 4
          %v703 = vsel %vm430, %v702, %v535
          %v704 = vrot.slane %v535, 4
          %v705 = vsel %vm430, %v539, %v704
          %v707 = vunpack.c.l.s4 1983009808
          %v708 = vunpack.c.0.s8 %v707
          %v709 = vperm.slane %v703, %v708
          %v711 = vunpack.c.l.s4 1983009808
          %v712 = vunpack.c.0.s8 %v711
          %v713 = vperm.slane %v705, %v712
          %v714 = vrot.slane %v541, 4
          %v715 = vsel %vm430, %v714, %v537
          %v716 = vrot.slane %v537, 4
          %v717 = vsel %vm430, %v541, %v716
          %v719 = vunpack.c.l.s4 1983009808
          %v720 = vunpack.c.0.s8 %v719
          %v721 = vperm.slane %v715, %v720
          %v723 = vunpack.c.l.s4 1983009808
          %v724 = vunpack.c.0.s8 %v723
          %v725 = vperm.slane %v717, %v724
          %v726 = vrot.slane %v697, 4
          %v727 = vsel %vm430, %v726, %v685
          %v728 = vrot.slane %v685, 4
          %v729 = vsel %vm430, %v697, %v728
          %v731 = vunpack.c.l.s4 1934713408
          %v732 = vunpack.c.0.s8 %v731
          %v733 = vperm.slane %v727, %v732
          %v735 = vunpack.c.l.s4 1934713408
          %v736 = vunpack.c.0.s8 %v735
          %v737 = vperm.slane %v729, %v736
          %v738 = vrot.slane %v701, 4
          %v739 = vsel %vm430, %v738, %v689
          %v740 = vrot.slane %v689, 4
          %v741 = vsel %vm430, %v701, %v740
          %v743 = vunpack.c.l.s4 1934713408
          %v744 = vunpack.c.0.s8 %v743
          %v745 = vperm.slane %v739, %v744
          %v747 = vunpack.c.l.s4 1934713408
          %v748 = vunpack.c.0.s8 %v747
          %v749 = vperm.slane %v741, %v748
          %v750 = vrot.slane %v721, 4
          %v751 = vsel %vm430, %v750, %v709
          %v752 = vrot.slane %v709, 4
          %v753 = vsel %vm430, %v721, %v752
          %v755 = vunpack.c.l.s4 1934713408
          %v756 = vunpack.c.0.s8 %v755
          %v757 = vperm.slane %v751, %v756
          %v759 = vunpack.c.l.s4 1934713408
          %v760 = vunpack.c.0.s8 %v759
          %v761 = vperm.slane %v753, %v760
          %v762 = vrot.slane %v725, 4
          %v763 = vsel %vm430, %v762, %v713
          %v764 = vrot.slane %v713, 4
          %v765 = vsel %vm430, %v725, %v764
          %v767 = vunpack.c.l.s4 1934713408
          %v768 = vunpack.c.0.s8 %v767
          %v769 = vperm.slane %v763, %v768
          %v771 = vunpack.c.l.s4 1934713408
          %v772 = vunpack.c.0.s8 %v771
          %v773 = vperm.slane %v765, %v772
          %v774 = vrot.slane %v757, 4
          %v775 = vsel %vm430, %v774, %v733
          %v776 = vrot.slane %v733, 4
          %v777 = vsel %vm430, %v757, %v776
          %v778 = vrot.slane %v761, 4
          %v779 = vsel %vm430, %v778, %v737
          %v780 = vrot.slane %v737, 4
          %v781 = vsel %vm430, %v761, %v780
          %v782 = vrot.slane %v769, 4
          %v783 = vsel %vm430, %v782, %v745
          %v784 = vrot.slane %v745, 4
          %v785 = vsel %vm430, %v769, %v784
          %v786 = vrot.slane %v773, 4
          %v787 = vsel %vm430, %v786, %v749
          %v788 = vrot.slane %v749, 4
          %v789 = vsel %vm430, %v773, %v788
          %vm790 = vcmask 31744
          %791 = vst.msk [vmem:[#allocation2] sm:$0xff] %vm790, %v775
          %792 = vst.msk [vmem:[#allocation2 + $0x8] sm:$0xff] %vm790, %v777
          %793 = vst.msk [vmem:[#allocation2 + $0x10] sm:$0xff] %vm790, %v779
          %794 = vst.msk [vmem:[#allocation2 + $0x18] sm:$0xff] %vm790, %v781
          %795 = vst.msk [vmem:[#allocation2 + $0x20] sm:$0xff] %vm790, %v783
          %796 = vst.msk [vmem:[#allocation2 + $0x28] sm:$0xff] %vm790, %v785
          %797 = vst.msk [vmem:[#allocation2 + $0x30] sm:$0xff] %vm790, %v787
          %798 = vst.msk [vmem:[#allocation2 + $0x38] sm:$0xff] %vm790, %v789
          %v799 = vrot.slane %v667, 4
          %v800 = vsel %vm430, %v799, %v663
          %v801 = vrot.slane %v663, 4
          %v802 = vsel %vm430, %v667, %v801
          %v804 = vunpack.c.l.s4 1983009808
          %v805 = vunpack.c.0.s8 %v804
          %v806 = vperm.slane %v800, %v805
          %v808 = vunpack.c.l.s4 1983009808
          %v809 = vunpack.c.0.s8 %v808
          %v810 = vperm.slane %v802, %v809
          %v811 = vrot.slane %v669, 4
          %v812 = vsel %vm430, %v811, %v665
          %v813 = vrot.slane %v665, 4
          %v814 = vsel %vm430, %v669, %v813
          %v816 = vunpack.c.l.s4 1983009808
          %v817 = vunpack.c.0.s8 %v816
          %v818 = vperm.slane %v812, %v817
          %v820 = vunpack.c.l.s4 1983009808
          %v821 = vunpack.c.0.s8 %v820
          %v822 = vperm.slane %v814, %v821
          %v823 = vrot.slane %v675, 4
          %v824 = vsel %vm430, %v823, %v671
          %v825 = vrot.slane %v671, 4
          %v826 = vsel %vm430, %v675, %v825
          %v828 = vunpack.c.l.s4 1983009808
          %v829 = vunpack.c.0.s8 %v828
          %v830 = vperm.slane %v824, %v829
          %v832 = vunpack.c.l.s4 1983009808
          %v833 = vunpack.c.0.s8 %v832
          %v834 = vperm.slane %v826, %v833
          %v835 = vrot.slane %v677, 4
          %v836 = vsel %vm430, %v835, %v673
          %v837 = vrot.slane %v673, 4
          %v838 = vsel %vm430, %v677, %v837
          %v840 = vunpack.c.l.s4 1983009808
          %v841 = vunpack.c.0.s8 %v840
          %v842 = vperm.slane %v836, %v841
          %v844 = vunpack.c.l.s4 1983009808
          %v845 = vunpack.c.0.s8 %v844
          %v846 = vperm.slane %v838, %v845
          %v847 = vrot.slane %v818, 4
          %v848 = vsel %vm430, %v847, %v806
          %v849 = vrot.slane %v806, 4
          %v850 = vsel %vm430, %v818, %v849
          %v852 = vunpack.c.l.s4 1934713408
          %v853 = vunpack.c.0.s8 %v852
          %v854 = vperm.slane %v848, %v853
          %v856 = vunpack.c.l.s4 1934713408
          %v857 = vunpack.c.0.s8 %v856
          %v858 = vperm.slane %v850, %v857
          %v859 = vrot.slane %v822, 4
          %v860 = vsel %vm430, %v859, %v810
          %v861 = vrot.slane %v810, 4
          %v862 = vsel %vm430, %v822, %v861
          %v864 = vunpack.c.l.s4 1934713408
          %v865 = vunpack.c.0.s8 %v864
          %v866 = vperm.slane %v860, %v865
          %v868 = vunpack.c.l.s4 1934713408
          %v869 = vunpack.c.0.s8 %v868
          %v870 = vperm.slane %v862, %v869
          %v871 = vrot.slane %v842, 4
          %v872 = vsel %vm430, %v871, %v830
          %v873 = vrot.slane %v830, 4
          %v874 = vsel %vm430, %v842, %v873
          %v876 = vunpack.c.l.s4 1934713408
          %v877 = vunpack.c.0.s8 %v876
          %v878 = vperm.slane %v872, %v877
          %v880 = vunpack.c.l.s4 1934713408
          %v881 = vunpack.c.0.s8 %v880
          %v882 = vperm.slane %v874, %v881
          %v883 = vrot.slane %v846, 4
          %v884 = vsel %vm430, %v883, %v834
          %v885 = vrot.slane %v834, 4
          %v886 = vsel %vm430, %v846, %v885
          %v888 = vunpack.c.l.s4 1934713408
          %v889 = vunpack.c.0.s8 %v888
          %v890 = vperm.slane %v884, %v889
          %v892 = vunpack.c.l.s4 1934713408
          %v893 = vunpack.c.0.s8 %v892
          %v894 = vperm.slane %v886, %v893
          %v895 = vrot.slane %v878, 4
          %v896 = vsel %vm430, %v895, %v854
          %v897 = vrot.slane %v854, 4
          %v898 = vsel %vm430, %v878, %v897
          %v899 = vrot.slane %v882, 4
          %v900 = vsel %vm430, %v899, %v858
          %v901 = vrot.slane %v858, 4
          %v902 = vsel %vm430, %v882, %v901
          %v903 = vrot.slane %v890, 4
          %v904 = vsel %vm430, %v903, %v866
          %v905 = vrot.slane %v866, 4
          %v906 = vsel %vm430, %v890, %v905
          %v907 = vrot.slane %v894, 4
          %v908 = vsel %vm430, %v907, %v870
          %v909 = vrot.slane %v870, 4
          %v910 = vsel %vm430, %v894, %v909
          %911 = vst.msk [vmem:[#allocation3] sm:$0xff] %vm790, %v896
          %912 = vst.msk [vmem:[#allocation3 + $0x8] sm:$0xff] %vm790, %v898
          %913 = vst.msk [vmem:[#allocation3 + $0x10] sm:$0xff] %vm790, %v900
          %914 = vst.msk [vmem:[#allocation3 + $0x18] sm:$0xff] %vm790, %v902
          %915 = vst.msk [vmem:[#allocation3 + $0x20] sm:$0xff] %vm790, %v904
          %916 = vst.msk [vmem:[#allocation3 + $0x28] sm:$0xff] %vm790, %v906
          %917 = vst.msk [vmem:[#allocation3 + $0x30] sm:$0xff] %vm790, %v908
          %918 = vst.msk [vmem:[#allocation3 + $0x38] sm:$0xff] %vm790, %v910
        $region68: #{tpu_custom_call.1} parent=43 // pred_fallthru
          _
        %v919 = vld [vmem:[%s314] sm:$0xff]
        %v920 = vld [vmem:[#allocation9] sm:$0xff]
        %v921 = vld [vmem:[#allocation9 + $0x8] sm:$0xff]
        %v922 = vld [vmem:[#allocation9 + $0x10] sm:$0xff]
        %v923 = vld [vmem:[#allocation9 + $0x18] sm:$0xff]
        %vm924 = vcmask 261120
        %v926 = vsel %vm924, %v919, 0
        %928 = vmatpush.msra.mxu0 0.0
        %929 = vmatpush.msra.mxu0 0.0
        %930 = vmatpush.msra.mxu0 0.0
        %931 = vmatpush.msra.mxu0 0.0
        %932 = vmatpush.msra.mxu0 0.0
        %933 = vmatpush.msra.mxu0 0.0
        %934 = vmatpush.msra.mxu0 0.0
        %935 = vmatpush.msra.mxu0 0.0
        %936 = vmatpush.msra.mxu0 0.0
        %937 = vmatpush.msra.mxu0 0.0
        %938 = vmatpush.msra.mxu0 0.0
        %939 = vmatpush.msra.mxu0 0.0
        %940 = vmatpush.msra.mxu0 %v923
        %941 = vmatpush.msra.mxu0 %v922
        %942 = vmatpush.msra.mxu0 %v921
        %943 = vmatpush.msra.mxu0 %v920
        %944 = vmatmul.f32.gmra.mxu0 %v926
        %v945 = vpop.f32.mrf.mxu0
        %v946 = vadd.f32 0.0, %v945
        %947 = vdwg.mxu0
        %949 = vrot.lane.b32.xlu0 %v946, 124
        %v950 = vpop.permute.xlu0 %949
        %952 = vrot.lane.b32.xlu0 %v946, 120
        %v953 = vpop.permute.xlu0 %952
        %955 = vrot.lane.b32.xlu0 %v946, 116
        %v956 = vpop.permute.xlu0 %955
        %958 = vrot.lane.b32.xlu0 %v946, 112
        %v959 = vpop.permute.xlu0 %958
        %961 = vrot.lane.b32.xlu0 %v946, 108
        %v962 = vpop.permute.xlu0 %961
        %964 = vrot.lane.b32.xlu0 %v946, 104
        %v965 = vpop.permute.xlu0 %964
        %967 = vrot.lane.b32.xlu0 %v946, 100
        %v968 = vpop.permute.xlu0 %967
        %v970 = vrot.slane %v953, 4
        %vm971 = vcmask 1047556
        %v972 = vsel %vm971, %v970, %v946
        %v973 = vrot.slane %v946, 4
        %v974 = vsel %vm971, %v953, %v973
        %v976 = vunpack.c.l.s4 1983009808
        %v977 = vunpack.c.0.s8 %v976
        %v978 = vperm.slane %v972, %v977
        %v980 = vunpack.c.l.s4 1983009808
        %v981 = vunpack.c.0.s8 %v980
        %v982 = vperm.slane %v974, %v981
        %v983 = vrot.slane %v956, 4
        %v984 = vsel %vm971, %v983, %v950
        %v985 = vrot.slane %v950, 4
        %v986 = vsel %vm971, %v956, %v985
        %v988 = vunpack.c.l.s4 1983009808
        %v989 = vunpack.c.0.s8 %v988
        %v990 = vperm.slane %v984, %v989
        %v992 = vunpack.c.l.s4 1983009808
        %v993 = vunpack.c.0.s8 %v992
        %v994 = vperm.slane %v986, %v993
        %v995 = vrot.slane %v965, 4
        %v996 = vsel %vm971, %v995, %v959
        %v997 = vrot.slane %v959, 4
        %v998 = vsel %vm971, %v965, %v997
        %v1000 = vunpack.c.l.s4 1983009808
        %v1001 = vunpack.c.0.s8 %v1000
        %v1002 = vperm.slane %v996, %v1001
        %v1004 = vunpack.c.l.s4 1983009808
        %v1005 = vunpack.c.0.s8 %v1004
        %v1006 = vperm.slane %v998, %v1005
        %v1007 = vrot.slane %v968, 4
        %v1008 = vsel %vm971, %v1007, %v962
        %v1009 = vrot.slane %v962, 4
        %v1010 = vsel %vm971, %v968, %v1009
        %v1012 = vunpack.c.l.s4 1983009808
        %v1013 = vunpack.c.0.s8 %v1012
        %v1014 = vperm.slane %v1008, %v1013
        %v1016 = vunpack.c.l.s4 1983009808
        %v1017 = vunpack.c.0.s8 %v1016
        %v1018 = vperm.slane %v1010, %v1017
        %v1019 = vrot.slane %v990, 4
        %v1020 = vsel %vm971, %v1019, %v978
        %v1021 = vrot.slane %v978, 4
        %v1022 = vsel %vm971, %v990, %v1021
        %v1024 = vunpack.c.l.s4 1934713408
        %v1025 = vunpack.c.0.s8 %v1024
        %v1026 = vperm.slane %v1020, %v1025
        %v1028 = vunpack.c.l.s4 1934713408
        %v1029 = vunpack.c.0.s8 %v1028
        %v1030 = vperm.slane %v1022, %v1029
        %v1031 = vrot.slane %v994, 4
        %v1032 = vsel %vm971, %v1031, %v982
        %v1033 = vrot.slane %v982, 4
        %v1034 = vsel %vm971, %v994, %v1033
        %v1036 = vunpack.c.l.s4 1934713408
        %v1037 = vunpack.c.0.s8 %v1036
        %v1038 = vperm.slane %v1032, %v1037
        %v1040 = vunpack.c.l.s4 1934713408
        %v1041 = vunpack.c.0.s8 %v1040
        %v1042 = vperm.slane %v1034, %v1041
        %v1043 = vrot.slane %v1014, 4
        %v1044 = vsel %vm971, %v1043, %v1002
        %v1045 = vrot.slane %v1002, 4
        %v1046 = vsel %vm971, %v1014, %v1045
        %v1048 = vunpack.c.l.s4 1934713408
        %v1049 = vunpack.c.0.s8 %v1048
        %v1050 = vperm.slane %v1044, %v1049
        %v1052 = vunpack.c.l.s4 1934713408
        %v1053 = vunpack.c.0.s8 %v1052
        %v1054 = vperm.slane %v1046, %v1053
        %v1055 = vrot.slane %v1018, 4
        %v1056 = vsel %vm971, %v1055, %v1006
        %v1057 = vrot.slane %v1006, 4
        %v1058 = vsel %vm971, %v1018, %v1057
        %v1060 = vunpack.c.l.s4 1934713408
        %v1061 = vunpack.c.0.s8 %v1060
        %v1062 = vperm.slane %v1056, %v1061
        %v1064 = vunpack.c.l.s4 1934713408
        %v1065 = vunpack.c.0.s8 %v1064
        %v1066 = vperm.slane %v1058, %v1065
        %v1067 = vrot.slane %v1050, 4
        %v1068 = vsel %vm971, %v1067, %v1026
        %v1069 = vrot.slane %v1026, 4
        %v1070 = vsel %vm971, %v1050, %v1069
        %v1071 = vrot.slane %v1054, 4
        %v1072 = vsel %vm971, %v1071, %v1030
        %v1073 = vrot.slane %v1030, 4
        %v1074 = vsel %vm971, %v1054, %v1073
        %v1075 = vrot.slane %v1062, 4
        %v1076 = vsel %vm971, %v1075, %v1038
        %v1077 = vrot.slane %v1038, 4
        %v1078 = vsel %vm971, %v1062, %v1077
        %v1079 = vrot.slane %v1066, 4
        %v1080 = vsel %vm971, %v1079, %v1042
        %v1081 = vrot.slane %v1042, 4
        %v1082 = vsel %vm971, %v1066, %v1081
        %v1083 = vrot.slane %v1072, 4
        %v1084 = vsel %vm971, %v1083, %v1068
        %v1085 = vrot.slane %v1068, 4
        %v1086 = vsel %vm971, %v1072, %v1085
        %v1088 = vunpack.c.l.s4 1983009808
        %v1089 = vunpack.c.0.s8 %v1088
        %v1090 = vperm.slane %v1084, %v1089
        %v1092 = vunpack.c.l.s4 1983009808
        %v1093 = vunpack.c.0.s8 %v1092
        %v1094 = vperm.slane %v1086, %v1093
        %v1095 = vrot.slane %v1074, 4
        %v1096 = vsel %vm971, %v1095, %v1070
        %v1097 = vrot.slane %v1070, 4
        %v1098 = vsel %vm971, %v1074, %v1097
        %v1100 = vunpack.c.l.s4 1983009808
        %v1101 = vunpack.c.0.s8 %v1100
        %v1102 = vperm.slane %v1096, %v1101
        %v1104 = vunpack.c.l.s4 1983009808
        %v1105 = vunpack.c.0.s8 %v1104
        %v1106 = vperm.slane %v1098, %v1105
        %v1107 = vrot.slane %v1080, 4
        %v1108 = vsel %vm971, %v1107, %v1076
        %v1109 = vrot.slane %v1076, 4
        %v1110 = vsel %vm971, %v1080, %v1109
        %v1112 = vunpack.c.l.s4 1983009808
        %v1113 = vunpack.c.0.s8 %v1112
        %v1114 = vperm.slane %v1108, %v1113
        %v1116 = vunpack.c.l.s4 1983009808
        %v1117 = vunpack.c.0.s8 %v1116
        %v1118 = vperm.slane %v1110, %v1117
        %v1119 = vrot.slane %v1082, 4
        %v1120 = vsel %vm971, %v1119, %v1078
        %v1121 = vrot.slane %v1078, 4
        %v1122 = vsel %vm971, %v1082, %v1121
        %v1124 = vunpack.c.l.s4 1983009808
        %v1125 = vunpack.c.0.s8 %v1124
        %v1126 = vperm.slane %v1120, %v1125
        %v1128 = vunpack.c.l.s4 1983009808
        %v1129 = vunpack.c.0.s8 %v1128
        %v1130 = vperm.slane %v1122, %v1129
        %v1131 = vrot.slane %v1102, 4
        %v1132 = vsel %vm971, %v1131, %v1090
        %v1133 = vrot.slane %v1090, 4
        %v1134 = vsel %vm971, %v1102, %v1133
        %v1136 = vunpack.c.l.s4 1934713408
        %v1137 = vunpack.c.0.s8 %v1136
        %v1138 = vperm.slane %v1132, %v1137
        %v1140 = vunpack.c.l.s4 1934713408
        %v1141 = vunpack.c.0.s8 %v1140
        %v1142 = vperm.slane %v1134, %v1141
        %v1143 = vrot.slane %v1106, 4
        %v1144 = vsel %vm971, %v1143, %v1094
        %v1145 = vrot.slane %v1094, 4
        %v1146 = vsel %vm971, %v1106, %v1145
        %v1148 = vunpack.c.l.s4 1934713408
        %v1149 = vunpack.c.0.s8 %v1148
        %v1150 = vperm.slane %v1144, %v1149
        %v1152 = vunpack.c.l.s4 1934713408
        %v1153 = vunpack.c.0.s8 %v1152
        %v1154 = vperm.slane %v1146, %v1153
        %v1155 = vrot.slane %v1126, 4
        %v1156 = vsel %vm971, %v1155, %v1114
        %v1157 = vrot.slane %v1114, 4
        %v1158 = vsel %vm971, %v1126, %v1157
        %v1160 = vunpack.c.l.s4 1934713408
        %v1161 = vunpack.c.0.s8 %v1160
        %v1162 = vperm.slane %v1156, %v1161
        %v1164 = vunpack.c.l.s4 1934713408
        %v1165 = vunpack.c.0.s8 %v1164
        %v1166 = vperm.slane %v1158, %v1165
        %v1167 = vrot.slane %v1130, 4
        %v1168 = vsel %vm971, %v1167, %v1118
        %v1169 = vrot.slane %v1118, 4
        %v1170 = vsel %vm971, %v1130, %v1169
        %v1172 = vunpack.c.l.s4 1934713408
        %v1173 = vunpack.c.0.s8 %v1172
        %v1174 = vperm.slane %v1168, %v1173
        %v1176 = vunpack.c.l.s4 1934713408
        %v1177 = vunpack.c.0.s8 %v1176
        %v1178 = vperm.slane %v1170, %v1177
        %v1179 = vrot.slane %v1162, 4
        %v1180 = vsel %vm971, %v1179, %v1138
        %v1181 = vrot.slane %v1138, 4
        %v1182 = vsel %vm971, %v1162, %v1181
        %v1183 = vrot.slane %v1166, 4
        %v1184 = vsel %vm971, %v1183, %v1142
        %v1185 = vrot.slane %v1142, 4
        %v1186 = vsel %vm971, %v1166, %v1185
        %v1187 = vrot.slane %v1174, 4
        %v1188 = vsel %vm971, %v1187, %v1150
        %v1189 = vrot.slane %v1150, 4
        %v1190 = vsel %vm971, %v1174, %v1189
        %v1191 = vrot.slane %v1178, 4
        %v1192 = vsel %vm971, %v1191, %v1154
        %v1193 = vrot.slane %v1154, 4
        %v1194 = vsel %vm971, %v1178, %v1193
        %v1195 = vld [vmem:[#allocation2] sm:$0xff]
        %v1196 = vld [vmem:[#allocation2 + $0x8] sm:$0xff]
        %v1197 = vld [vmem:[#allocation2 + $0x10] sm:$0xff]
        %v1198 = vld [vmem:[#allocation2 + $0x18] sm:$0xff]
        %v1199 = vld [vmem:[#allocation2 + $0x20] sm:$0xff]
        %v1200 = vld [vmem:[#allocation2 + $0x28] sm:$0xff]
        %v1201 = vld [vmem:[#allocation2 + $0x30] sm:$0xff]
        %v1202 = vld [vmem:[#allocation2 + $0x38] sm:$0xff]
        %vm1203 = vcmask 31744
        %v1205 = vsel %vm1203, %v1180, 0
        %v1208 = vsel %vm1203, %v1195, 0
        %1210 = vmatpush.xpose.msra.mxu0 0.0
        %1211 = vmatpush.xpose.msra.mxu0 0.0
        %1212 = vmatpush.xpose.msra.mxu0 0.0
        %1213 = vmatpush.xpose.msra.mxu0 0.0
        %1214 = vmatpush.xpose.msra.mxu0 0.0
        %1215 = vmatpush.xpose.msra.mxu0 0.0
        %1216 = vmatpush.xpose.msra.mxu0 0.0
        %1217 = vmatpush.xpose.msra.mxu0 0.0
        %1218 = vmatpush.xpose.msra.mxu0 0.0
        %1219 = vmatpush.xpose.msra.mxu0 0.0
        %1220 = vmatpush.xpose.msra.mxu0 0.0
        %1221 = vmatpush.xpose.msra.mxu0 0.0
        %1222 = vmatpush.xpose.msra.mxu0 0.0
        %1223 = vmatpush.xpose.msra.mxu0 0.0
        %1224 = vmatpush.xpose.msra.mxu0 0.0
        %1225 = vmatpush.xpose.msra.mxu0 %v1208
        %1226 = vmatmul.f32.gmra.mxu0 %v1205
        %v1227 = vpop.f32.mrf.mxu0
        %v1228 = vadd.f32 0.0, %v1227
        %1229 = vdwg.mxu0
        %v1231 = vsel %vm1203, %v1182, 0
        %v1234 = vsel %vm1203, %v1196, 0
        %1236 = vmatpush.xpose.msra.mxu0 0.0
        %1237 = vmatpush.xpose.msra.mxu0 0.0
        %1238 = vmatpush.xpose.msra.mxu0 0.0
        %1239 = vmatpush.xpose.msra.mxu0 0.0
        %1240 = vmatpush.xpose.msra.mxu0 0.0
        %1241 = vmatpush.xpose.msra.mxu0 0.0
        %1242 = vmatpush.xpose.msra.mxu0 0.0
        %1243 = vmatpush.xpose.msra.mxu0 0.0
        %1244 = vmatpush.xpose.msra.mxu0 0.0
        %1245 = vmatpush.xpose.msra.mxu0 0.0
        %1246 = vmatpush.xpose.msra.mxu0 0.0
        %1247 = vmatpush.xpose.msra.mxu0 0.0
        %1248 = vmatpush.xpose.msra.mxu0 0.0
        %1249 = vmatpush.xpose.msra.mxu0 0.0
        %1250 = vmatpush.xpose.msra.mxu0 0.0
        %1251 = vmatpush.xpose.msra.mxu0 %v1234
        %1252 = vmatmul.f32.gmra.mxu0 %v1231
        %v1253 = vpop.f32.mrf.mxu0
        %v1254 = vadd.f32 0.0, %v1253
        %1255 = vdwg.mxu0
        %v1257 = vsel %vm1203, %v1184, 0
        %v1260 = vsel %vm1203, %v1197, 0
        %1262 = vmatpush.xpose.msra.mxu0 0.0
        %1263 = vmatpush.xpose.msra.mxu0 0.0
        %1264 = vmatpush.xpose.msra.mxu0 0.0
        %1265 = vmatpush.xpose.msra.mxu0 0.0
        %1266 = vmatpush.xpose.msra.mxu0 0.0
        %1267 = vmatpush.xpose.msra.mxu0 0.0
        %1268 = vmatpush.xpose.msra.mxu0 0.0
        %1269 = vmatpush.xpose.msra.mxu0 0.0
        %1270 = vmatpush.xpose.msra.mxu0 0.0
        %1271 = vmatpush.xpose.msra.mxu0 0.0
        %1272 = vmatpush.xpose.msra.mxu0 0.0
        %1273 = vmatpush.xpose.msra.mxu0 0.0
        %1274 = vmatpush.xpose.msra.mxu0 0.0
        %1275 = vmatpush.xpose.msra.mxu0 0.0
        %1276 = vmatpush.xpose.msra.mxu0 0.0
        %1277 = vmatpush.xpose.msra.mxu0 %v1260
        %1278 = vmatmul.f32.gmra.mxu0 %v1257
        %v1279 = vpop.f32.mrf.mxu0
        %v1280 = vadd.f32 0.0, %v1279
        %1281 = vdwg.mxu0
        %v1283 = vsel %vm1203, %v1186, 0
        %v1286 = vsel %vm1203, %v1198, 0
        %1288 = vmatpush.xpose.msra.mxu0 0.0
        %1289 = vmatpush.xpose.msra.mxu0 0.0
        %1290 = vmatpush.xpose.msra.mxu0 0.0
        %1291 = vmatpush.xpose.msra.mxu0 0.0
        %1292 = vmatpush.xpose.msra.mxu0 0.0
        %1293 = vmatpush.xpose.msra.mxu0 0.0
        %1294 = vmatpush.xpose.msra.mxu0 0.0
        %1295 = vmatpush.xpose.msra.mxu0 0.0
        %1296 = vmatpush.xpose.msra.mxu0 0.0
        %1297 = vmatpush.xpose.msra.mxu0 0.0
        %1298 = vmatpush.xpose.msra.mxu0 0.0
        %1299 = vmatpush.xpose.msra.mxu0 0.0
        %1300 = vmatpush.xpose.msra.mxu0 0.0
        %1301 = vmatpush.xpose.msra.mxu0 0.0
        %1302 = vmatpush.xpose.msra.mxu0 0.0
        %1303 = vmatpush.xpose.msra.mxu0 %v1286
        %1304 = vmatmul.f32.gmra.mxu0 %v1283
        %v1305 = vpop.f32.mrf.mxu0
        %v1306 = vadd.f32 0.0, %v1305
        %1307 = vdwg.mxu0
        %v1309 = vsel %vm1203, %v1188, 0
        %v1312 = vsel %vm1203, %v1199, 0
        %1314 = vmatpush.xpose.msra.mxu0 0.0
        %1315 = vmatpush.xpose.msra.mxu0 0.0
        %1316 = vmatpush.xpose.msra.mxu0 0.0
        %1317 = vmatpush.xpose.msra.mxu0 0.0
        %1318 = vmatpush.xpose.msra.mxu0 0.0
        %1319 = vmatpush.xpose.msra.mxu0 0.0
        %1320 = vmatpush.xpose.msra.mxu0 0.0
        %1321 = vmatpush.xpose.msra.mxu0 0.0
        %1322 = vmatpush.xpose.msra.mxu0 0.0
        %1323 = vmatpush.xpose.msra.mxu0 0.0
        %1324 = vmatpush.xpose.msra.mxu0 0.0
        %1325 = vmatpush.xpose.msra.mxu0 0.0
        %1326 = vmatpush.xpose.msra.mxu0 0.0
        %1327 = vmatpush.xpose.msra.mxu0 0.0
        %1328 = vmatpush.xpose.msra.mxu0 0.0
        %1329 = vmatpush.xpose.msra.mxu0 %v1312
        %1330 = vmatmul.f32.gmra.mxu0 %v1309
        %v1331 = vpop.f32.mrf.mxu0
        %v1332 = vadd.f32 0.0, %v1331
        %1333 = vdwg.mxu0
        %v1335 = vsel %vm1203, %v1190, 0
        %v1338 = vsel %vm1203, %v1200, 0
        %1340 = vmatpush.xpose.msra.mxu0 0.0
        %1341 = vmatpush.xpose.msra.mxu0 0.0
        %1342 = vmatpush.xpose.msra.mxu0 0.0
        %1343 = vmatpush.xpose.msra.mxu0 0.0
        %1344 = vmatpush.xpose.msra.mxu0 0.0
        %1345 = vmatpush.xpose.msra.mxu0 0.0
        %1346 = vmatpush.xpose.msra.mxu0 0.0
        %1347 = vmatpush.xpose.msra.mxu0 0.0
        %1348 = vmatpush.xpose.msra.mxu0 0.0
        %1349 = vmatpush.xpose.msra.mxu0 0.0
        %1350 = vmatpush.xpose.msra.mxu0 0.0
        %1351 = vmatpush.xpose.msra.mxu0 0.0
        %1352 = vmatpush.xpose.msra.mxu0 0.0
        %1353 = vmatpush.xpose.msra.mxu0 0.0
        %1354 = vmatpush.xpose.msra.mxu0 0.0
        %1355 = vmatpush.xpose.msra.mxu0 %v1338
        %1356 = vmatmul.f32.gmra.mxu0 %v1335
        %v1357 = vpop.f32.mrf.mxu0
        %v1358 = vadd.f32 0.0, %v1357
        %1359 = vdwg.mxu0
        %v1361 = vsel %vm1203, %v1192, 0
        %v1364 = vsel %vm1203, %v1201, 0
        %1366 = vmatpush.xpose.msra.mxu0 0.0
        %1367 = vmatpush.xpose.msra.mxu0 0.0
        %1368 = vmatpush.xpose.msra.mxu0 0.0
        %1369 = vmatpush.xpose.msra.mxu0 0.0
        %1370 = vmatpush.xpose.msra.mxu0 0.0
        %1371 = vmatpush.xpose.msra.mxu0 0.0
        %1372 = vmatpush.xpose.msra.mxu0 0.0
        %1373 = vmatpush.xpose.msra.mxu0 0.0
        %1374 = vmatpush.xpose.msra.mxu0 0.0
        %1375 = vmatpush.xpose.msra.mxu0 0.0
        %1376 = vmatpush.xpose.msra.mxu0 0.0
        %1377 = vmatpush.xpose.msra.mxu0 0.0
        %1378 = vmatpush.xpose.msra.mxu0 0.0
        %1379 = vmatpush.xpose.msra.mxu0 0.0
        %1380 = vmatpush.xpose.msra.mxu0 0.0
        %1381 = vmatpush.xpose.msra.mxu0 %v1364
        %1382 = vmatmul.f32.gmra.mxu0 %v1361
        %v1383 = vpop.f32.mrf.mxu0
        %v1384 = vadd.f32 0.0, %v1383
        %1385 = vdwg.mxu0
        %v1387 = vsel %vm1203, %v1194, 0
        %v1390 = vsel %vm1203, %v1202, 0
        %1392 = vmatpush.xpose.msra.mxu0 0.0
        %1393 = vmatpush.xpose.msra.mxu0 0.0
        %1394 = vmatpush.xpose.msra.mxu0 0.0
        %1395 = vmatpush.xpose.msra.mxu0 0.0
        %1396 = vmatpush.xpose.msra.mxu0 0.0
        %1397 = vmatpush.xpose.msra.mxu0 0.0
        %1398 = vmatpush.xpose.msra.mxu0 0.0
        %1399 = vmatpush.xpose.msra.mxu0 0.0
        %1400 = vmatpush.xpose.msra.mxu0 0.0
        %1401 = vmatpush.xpose.msra.mxu0 0.0
        %1402 = vmatpush.xpose.msra.mxu0 0.0
        %1403 = vmatpush.xpose.msra.mxu0 0.0
        %1404 = vmatpush.xpose.msra.mxu0 0.0
        %1405 = vmatpush.xpose.msra.mxu0 0.0
        %1406 = vmatpush.xpose.msra.mxu0 0.0
        %1407 = vmatpush.xpose.msra.mxu0 %v1390
        %1408 = vmatmul.f32.gmra.mxu0 %v1387
        %v1409 = vpop.f32.mrf.mxu0
        %v1410 = vadd.f32 0.0, %v1409
        %1411 = vdwg.mxu0
        %vm1412 = vcmask 64512
        %v1413 = vsel %vm1412, %v1228, -inf
        %1414 = vmax.xlane.f32.xlu0 %v1413
        %v1415 = vpop.xlane.xlu0 %1414
        %v1416 = vsel %vm1412, %v1254, -inf
        %1417 = vmax.xlane.f32.xlu0 %v1416
        %v1418 = vpop.xlane.xlu0 %1417
        %v1419 = vsel %vm1412, %v1280, -inf
        %1420 = vmax.xlane.f32.xlu0 %v1419
        %v1421 = vpop.xlane.xlu0 %1420
        %v1422 = vsel %vm1412, %v1306, -inf
        %1423 = vmax.xlane.f32.xlu0 %v1422
        %v1424 = vpop.xlane.xlu0 %1423
        %v1425 = vsel %vm1412, %v1332, -inf
        %1426 = vmax.xlane.f32.xlu0 %v1425
        %v1427 = vpop.xlane.xlu0 %1426
        %v1428 = vsel %vm1412, %v1358, -inf
        %1429 = vmax.xlane.f32.xlu0 %v1428
        %v1430 = vpop.xlane.xlu0 %1429
        %v1431 = vsel %vm1412, %v1384, -inf
        %1432 = vmax.xlane.f32.xlu0 %v1431
        %v1433 = vpop.xlane.xlu0 %1432
        %v1434 = vsel %vm1412, %v1410, -inf
        %1435 = vmax.xlane.f32.xlu0 %v1434
        %v1436 = vpop.xlane.xlu0 %1435
        %v1437 = vsub.f32 %v1228, %v1415
        %v1438 = vsub.f32 %v1254, %v1418
        %v1439 = vsub.f32 %v1280, %v1421
        %v1440 = vsub.f32 %v1306, %v1424
        %v1441 = vsub.f32 %v1332, %v1427
        %v1442 = vsub.f32 %v1358, %v1430
        %v1443 = vsub.f32 %v1384, %v1433
        %v1444 = vsub.f32 %v1410, %v1436
        %v1445 = vmul.f32 %v1437, 1.442695
        %v1446 = vpow.pop %v1445
        %v1447 = vmul.f32 %v1438, 1.442695
        %v1448 = vpow.pop %v1447
        %v1449 = vmul.f32 %v1439, 1.442695
        %v1450 = vpow.pop %v1449
        %v1451 = vmul.f32 %v1440, 1.442695
        %v1452 = vpow.pop %v1451
        %v1453 = vmul.f32 %v1441, 1.442695
        %v1454 = vpow.pop %v1453
        %v1455 = vmul.f32 %v1442, 1.442695
        %v1456 = vpow.pop %v1455
        %v1457 = vmul.f32 %v1443, 1.442695
        %v1458 = vpow.pop %v1457
        %v1459 = vmul.f32 %v1444, 1.442695
        %v1460 = vpow.pop %v1459
        %v1461 = vsel %vm1412, %v1446, 0.0
        %1462 = vadd.xlane.f32.xlu0 %v1461
        %v1463 = vpop.xlane.xlu0 %1462
        %v1464 = vsel %vm1412, %v1448, 0.0
        %1465 = vadd.xlane.f32.xlu0 %v1464
        %v1466 = vpop.xlane.xlu0 %1465
        %v1467 = vsel %vm1412, %v1450, 0.0
        %1468 = vadd.xlane.f32.xlu0 %v1467
        %v1469 = vpop.xlane.xlu0 %1468
        %v1470 = vsel %vm1412, %v1452, 0.0
        %1471 = vadd.xlane.f32.xlu0 %v1470
        %v1472 = vpop.xlane.xlu0 %1471
        %v1473 = vsel %vm1412, %v1454, 0.0
        %1474 = vadd.xlane.f32.xlu0 %v1473
        %v1475 = vpop.xlane.xlu0 %1474
        %v1476 = vsel %vm1412, %v1456, 0.0
        %1477 = vadd.xlane.f32.xlu0 %v1476
        %v1478 = vpop.xlane.xlu0 %1477
        %v1479 = vsel %vm1412, %v1458, 0.0
        %1480 = vadd.xlane.f32.xlu0 %v1479
        %v1481 = vpop.xlane.xlu0 %1480
        %v1482 = vsel %vm1412, %v1460, 0.0
        %1483 = vadd.xlane.f32.xlu0 %v1482
        %v1484 = vpop.xlane.xlu0 %1483
        %v1485 = vld [vmem:[#allocation3] sm:$0xff]
        %v1486 = vld [vmem:[#allocation3 + $0x8] sm:$0xff]
        %v1487 = vld [vmem:[#allocation3 + $0x10] sm:$0xff]
        %v1488 = vld [vmem:[#allocation3 + $0x18] sm:$0xff]
        %v1489 = vld [vmem:[#allocation3 + $0x20] sm:$0xff]
        %v1490 = vld [vmem:[#allocation3 + $0x28] sm:$0xff]
        %v1491 = vld [vmem:[#allocation3 + $0x30] sm:$0xff]
        %v1492 = vld [vmem:[#allocation3 + $0x38] sm:$0xff]
        %v1494 = vsel %vm1412, %v1446, 0
        %1496 = vmatpush.msra.mxu0 0.0
        %1497 = vmatpush.msra.mxu0 0.0
        %1498 = vmatpush.msra.mxu0 0.0
        %1499 = vmatpush.msra.mxu0 0.0
        %1500 = vmatpush.msra.mxu0 0.0
        %1501 = vmatpush.msra.mxu0 0.0
        %1502 = vmatpush.msra.mxu0 0.0
        %1503 = vmatpush.msra.mxu0 0.0
        %1504 = vmatpush.msra.mxu0 0.0
        %1505 = vmatpush.msra.mxu0 0.0
        %1506 = vmatpush.msra.mxu0 0.0
        %1507 = vmatpush.msra.mxu0 0.0
        %1508 = vmatpush.msra.mxu0 0.0
        %1509 = vmatpush.msra.mxu0 0.0
        %1510 = vmatpush.msra.mxu0 0.0
        %1511 = vmatpush.msra.mxu0 %v1485
        %1512 = vmatmul.f32.gmra.mxu0 %v1494
        %v1513 = vpop.f32.mrf.mxu0
        %v1514 = vadd.f32 0.0, %v1513
        %1515 = vdwg.mxu0
        %v1517 = vsel %vm1412, %v1448, 0
        %1519 = vmatpush.msra.mxu0 0.0
        %1520 = vmatpush.msra.mxu0 0.0
        %1521 = vmatpush.msra.mxu0 0.0
        %1522 = vmatpush.msra.mxu0 0.0
        %1523 = vmatpush.msra.mxu0 0.0
        %1524 = vmatpush.msra.mxu0 0.0
        %1525 = vmatpush.msra.mxu0 0.0
        %1526 = vmatpush.msra.mxu0 0.0
        %1527 = vmatpush.msra.mxu0 0.0
        %1528 = vmatpush.msra.mxu0 0.0
        %1529 = vmatpush.msra.mxu0 0.0
        %1530 = vmatpush.msra.mxu0 0.0
        %1531 = vmatpush.msra.mxu0 0.0
        %1532 = vmatpush.msra.mxu0 0.0
        %1533 = vmatpush.msra.mxu0 0.0
        %1534 = vmatpush.msra.mxu0 %v1486
        %1535 = vmatmul.f32.gmra.mxu0 %v1517
        %v1536 = vpop.f32.mrf.mxu0
        %v1537 = vadd.f32 0.0, %v1536
        %1538 = vdwg.mxu0
        %v1540 = vsel %vm1412, %v1450, 0
        %1542 = vmatpush.msra.mxu0 0.0
        %1543 = vmatpush.msra.mxu0 0.0
        %1544 = vmatpush.msra.mxu0 0.0
        %1545 = vmatpush.msra.mxu0 0.0
        %1546 = vmatpush.msra.mxu0 0.0
        %1547 = vmatpush.msra.mxu0 0.0
        %1548 = vmatpush.msra.mxu0 0.0
        %1549 = vmatpush.msra.mxu0 0.0
        %1550 = vmatpush.msra.mxu0 0.0
        %1551 = vmatpush.msra.mxu0 0.0
        %1552 = vmatpush.msra.mxu0 0.0
        %1553 = vmatpush.msra.mxu0 0.0
        %1554 = vmatpush.msra.mxu0 0.0
        %1555 = vmatpush.msra.mxu0 0.0
        %1556 = vmatpush.msra.mxu0 0.0
        %1557 = vmatpush.msra.mxu0 %v1487
        %1558 = vmatmul.f32.gmra.mxu0 %v1540
        %v1559 = vpop.f32.mrf.mxu0
        %v1560 = vadd.f32 0.0, %v1559
        %1561 = vdwg.mxu0
        %v1563 = vsel %vm1412, %v1452, 0
        %1565 = vmatpush.msra.mxu0 0.0
        %1566 = vmatpush.msra.mxu0 0.0
        %1567 = vmatpush.msra.mxu0 0.0
        %1568 = vmatpush.msra.mxu0 0.0
        %1569 = vmatpush.msra.mxu0 0.0
        %1570 = vmatpush.msra.mxu0 0.0
        %1571 = vmatpush.msra.mxu0 0.0
        %1572 = vmatpush.msra.mxu0 0.0
        %1573 = vmatpush.msra.mxu0 0.0
        %1574 = vmatpush.msra.mxu0 0.0
        %1575 = vmatpush.msra.mxu0 0.0
        %1576 = vmatpush.msra.mxu0 0.0
        %1577 = vmatpush.msra.mxu0 0.0
        %1578 = vmatpush.msra.mxu0 0.0
        %1579 = vmatpush.msra.mxu0 0.0
        %1580 = vmatpush.msra.mxu0 %v1488
        %1581 = vmatmul.f32.gmra.mxu0 %v1563
        %v1582 = vpop.f32.mrf.mxu0
        %v1583 = vadd.f32 0.0, %v1582
        %1584 = vdwg.mxu0
        %v1586 = vsel %vm1412, %v1454, 0
        %1588 = vmatpush.msra.mxu0 0.0
        %1589 = vmatpush.msra.mxu0 0.0
        %1590 = vmatpush.msra.mxu0 0.0
        %1591 = vmatpush.msra.mxu0 0.0
        %1592 = vmatpush.msra.mxu0 0.0
        %1593 = vmatpush.msra.mxu0 0.0
        %1594 = vmatpush.msra.mxu0 0.0
        %1595 = vmatpush.msra.mxu0 0.0
        %1596 = vmatpush.msra.mxu0 0.0
        %1597 = vmatpush.msra.mxu0 0.0
        %1598 = vmatpush.msra.mxu0 0.0
        %1599 = vmatpush.msra.mxu0 0.0
        %1600 = vmatpush.msra.mxu0 0.0
        %1601 = vmatpush.msra.mxu0 0.0
        %1602 = vmatpush.msra.mxu0 0.0
        %1603 = vmatpush.msra.mxu0 %v1489
        %1604 = vmatmul.f32.gmra.mxu0 %v1586
        %v1605 = vpop.f32.mrf.mxu0
        %v1606 = vadd.f32 0.0, %v1605
        %1607 = vdwg.mxu0
        %v1609 = vsel %vm1412, %v1456, 0
        %1611 = vmatpush.msra.mxu0 0.0
        %1612 = vmatpush.msra.mxu0 0.0
        %1613 = vmatpush.msra.mxu0 0.0
        %1614 = vmatpush.msra.mxu0 0.0
        %1615 = vmatpush.msra.mxu0 0.0
        %1616 = vmatpush.msra.mxu0 0.0
        %1617 = vmatpush.msra.mxu0 0.0
        %1618 = vmatpush.msra.mxu0 0.0
        %1619 = vmatpush.msra.mxu0 0.0
        %1620 = vmatpush.msra.mxu0 0.0
        %1621 = vmatpush.msra.mxu0 0.0
        %1622 = vmatpush.msra.mxu0 0.0
        %1623 = vmatpush.msra.mxu0 0.0
        %1624 = vmatpush.msra.mxu0 0.0
        %1625 = vmatpush.msra.mxu0 0.0
        %1626 = vmatpush.msra.mxu0 %v1490
        %1627 = vmatmul.f32.gmra.mxu0 %v1609
        %v1628 = vpop.f32.mrf.mxu0
        %v1629 = vadd.f32 0.0, %v1628
        %1630 = vdwg.mxu0
        %v1632 = vsel %vm1412, %v1458, 0
        %1634 = vmatpush.msra.mxu0 0.0
        %1635 = vmatpush.msra.mxu0 0.0
        %1636 = vmatpush.msra.mxu0 0.0
        %1637 = vmatpush.msra.mxu0 0.0
        %1638 = vmatpush.msra.mxu0 0.0
        %1639 = vmatpush.msra.mxu0 0.0
        %1640 = vmatpush.msra.mxu0 0.0
        %1641 = vmatpush.msra.mxu0 0.0
        %1642 = vmatpush.msra.mxu0 0.0
        %1643 = vmatpush.msra.mxu0 0.0
        %1644 = vmatpush.msra.mxu0 0.0
        %1645 = vmatpush.msra.mxu0 0.0
        %1646 = vmatpush.msra.mxu0 0.0
        %1647 = vmatpush.msra.mxu0 0.0
        %1648 = vmatpush.msra.mxu0 0.0
        %1649 = vmatpush.msra.mxu0 %v1491
        %1650 = vmatmul.f32.gmra.mxu0 %v1632
        %v1651 = vpop.f32.mrf.mxu0
        %v1652 = vadd.f32 0.0, %v1651
        %1653 = vdwg.mxu0
        %v1655 = vsel %vm1412, %v1460, 0
        %1657 = vmatpush.msra.mxu0 0.0
        %1658 = vmatpush.msra.mxu0 0.0
        %1659 = vmatpush.msra.mxu0 0.0
        %1660 = vmatpush.msra.mxu0 0.0
        %1661 = vmatpush.msra.mxu0 0.0
        %1662 = vmatpush.msra.mxu0 0.0
        %1663 = vmatpush.msra.mxu0 0.0
        %1664 = vmatpush.msra.mxu0 0.0
        %1665 = vmatpush.msra.mxu0 0.0
        %1666 = vmatpush.msra.mxu0 0.0
        %1667 = vmatpush.msra.mxu0 0.0
        %1668 = vmatpush.msra.mxu0 0.0
        %1669 = vmatpush.msra.mxu0 0.0
        %1670 = vmatpush.msra.mxu0 0.0
        %1671 = vmatpush.msra.mxu0 0.0
        %1672 = vmatpush.msra.mxu0 %v1492
        %1673 = vmatmul.f32.gmra.mxu0 %v1655
        %v1674 = vpop.f32.mrf.mxu0
        %v1675 = vadd.f32 0.0, %v1674
        %1676 = vdwg.mxu0
        %v1677 = vrcp.pop %v1463
        %v1678 = vrcp.pop %v1466
        %v1679 = vrcp.pop %v1469
        %v1680 = vrcp.pop %v1472
        %v1681 = vrcp.pop %v1475
        %v1682 = vrcp.pop %v1478
        %v1683 = vrcp.pop %v1481
        %v1684 = vrcp.pop %v1484
        %v1685 = vmul.f32 %v1514, %v1677
        %v1686 = vmul.f32 %v1537, %v1678
        %v1687 = vmul.f32 %v1560, %v1679
        %v1688 = vmul.f32 %v1583, %v1680
        %v1689 = vmul.f32 %v1606, %v1681
        %v1690 = vmul.f32 %v1629, %v1682
        %v1691 = vmul.f32 %v1652, %v1683
        %v1692 = vmul.f32 %v1675, %v1684
        %v1693 = vrot.slane %v1687, 4
        %v1694 = vsel %vm971, %v1693, %v1685
        %v1695 = vrot.slane %v1685, 4
        %v1696 = vsel %vm971, %v1687, %v1695
        %v1698 = vunpack.c.l.s4 1983009808
        %v1699 = vunpack.c.0.s8 %v1698
        %v1700 = vperm.slane %v1694, %v1699
        %v1702 = vunpack.c.l.s4 1983009808
        %v1703 = vunpack.c.0.s8 %v1702
        %v1704 = vperm.slane %v1696, %v1703
        %v1705 = vrot.slane %v1688, 4
        %v1706 = vsel %vm971, %v1705, %v1686
        %v1707 = vrot.slane %v1686, 4
        %v1708 = vsel %vm971, %v1688, %v1707
        %v1710 = vunpack.c.l.s4 1983009808
        %v1711 = vunpack.c.0.s8 %v1710
        %v1712 = vperm.slane %v1706, %v1711
        %v1714 = vunpack.c.l.s4 1983009808
        %v1715 = vunpack.c.0.s8 %v1714
        %v1716 = vperm.slane %v1708, %v1715
        %v1717 = vrot.slane %v1691, 4
        %v1718 = vsel %vm971, %v1717, %v1689
        %v1719 = vrot.slane %v1689, 4
        %v1720 = vsel %vm971, %v1691, %v1719
        %v1722 = vunpack.c.l.s4 1983009808
        %v1723 = vunpack.c.0.s8 %v1722
        %v1724 = vperm.slane %v1718, %v1723
        %v1726 = vunpack.c.l.s4 1983009808
        %v1727 = vunpack.c.0.s8 %v1726
        %v1728 = vperm.slane %v1720, %v1727
        %v1729 = vrot.slane %v1692, 4
        %v1730 = vsel %vm971, %v1729, %v1690
        %v1731 = vrot.slane %v1690, 4
        %v1732 = vsel %vm971, %v1692, %v1731
        %v1734 = vunpack.c.l.s4 1983009808
        %v1735 = vunpack.c.0.s8 %v1734
        %v1736 = vperm.slane %v1730, %v1735
        %v1738 = vunpack.c.l.s4 1983009808
        %v1739 = vunpack.c.0.s8 %v1738
        %v1740 = vperm.slane %v1732, %v1739
        %v1741 = vrot.slane %v1712, 4
        %v1742 = vsel %vm971, %v1741, %v1700
        %v1743 = vrot.slane %v1700, 4
        %v1744 = vsel %vm971, %v1712, %v1743
        %v1746 = vunpack.c.l.s4 1934713408
        %v1747 = vunpack.c.0.s8 %v1746
        %v1748 = vperm.slane %v1742, %v1747
        %v1750 = vunpack.c.l.s4 1934713408
        %v1751 = vunpack.c.0.s8 %v1750
        %v1752 = vperm.slane %v1744, %v1751
        %v1753 = vrot.slane %v1716, 4
        %v1754 = vsel %vm971, %v1753, %v1704
        %v1755 = vrot.slane %v1704, 4
        %v1756 = vsel %vm971, %v1716, %v1755
        %v1758 = vunpack.c.l.s4 1934713408
        %v1759 = vunpack.c.0.s8 %v1758
        %v1760 = vperm.slane %v1754, %v1759
        %v1762 = vunpack.c.l.s4 1934713408
        %v1763 = vunpack.c.0.s8 %v1762
        %v1764 = vperm.slane %v1756, %v1763
        %v1765 = vrot.slane %v1736, 4
        %v1766 = vsel %vm971, %v1765, %v1724
        %v1767 = vrot.slane %v1724, 4
        %v1768 = vsel %vm971, %v1736, %v1767
        %v1770 = vunpack.c.l.s4 1934713408
        %v1771 = vunpack.c.0.s8 %v1770
        %v1772 = vperm.slane %v1766, %v1771
        %v1774 = vunpack.c.l.s4 1934713408
        %v1775 = vunpack.c.0.s8 %v1774
        %v1776 = vperm.slane %v1768, %v1775
        %v1777 = vrot.slane %v1740, 4
        %v1778 = vsel %vm971, %v1777, %v1728
        %v1779 = vrot.slane %v1728, 4
        %v1780 = vsel %vm971, %v1740, %v1779
        %v1782 = vunpack.c.l.s4 1934713408
        %v1783 = vunpack.c.0.s8 %v1782
        %v1784 = vperm.slane %v1778, %v1783
        %v1786 = vunpack.c.l.s4 1934713408
        %v1787 = vunpack.c.0.s8 %v1786
        %v1788 = vperm.slane %v1780, %v1787
        %v1789 = vrot.slane %v1772, 4
        %v1790 = vsel %vm971, %v1789, %v1748
        %v1791 = vrot.slane %v1748, 4
        %v1792 = vsel %vm971, %v1772, %v1791
        %v1793 = vrot.slane %v1776, 4
        %v1794 = vsel %vm971, %v1793, %v1752
        %v1795 = vrot.slane %v1752, 4
        %v1796 = vsel %vm971, %v1776, %v1795
        %v1797 = vrot.slane %v1784, 4
        %v1798 = vsel %vm971, %v1797, %v1760
        %v1799 = vrot.slane %v1760, 4
        %v1800 = vsel %vm971, %v1784, %v1799
        %v1801 = vrot.slane %v1788, 4
        %v1802 = vsel %vm971, %v1801, %v1764
        %v1803 = vrot.slane %v1764, 4
        %v1804 = vsel %vm971, %v1788, %v1803
        %v1805 = vrot.slane %v1794, 4
        %v1806 = vsel %vm971, %v1805, %v1790
        %v1807 = vrot.slane %v1790, 4
        %v1808 = vsel %vm971, %v1794, %v1807
        %v1810 = vunpack.c.l.s4 1983009808
        %v1811 = vunpack.c.0.s8 %v1810
        %v1812 = vperm.slane %v1806, %v1811
        %v1814 = vunpack.c.l.s4 1983009808
        %v1815 = vunpack.c.0.s8 %v1814
        %v1816 = vperm.slane %v1808, %v1815
        %v1817 = vrot.slane %v1796, 4
        %v1818 = vsel %vm971, %v1817, %v1792
        %v1819 = vrot.slane %v1792, 4
        %v1820 = vsel %vm971, %v1796, %v1819
        %v1822 = vunpack.c.l.s4 1983009808
        %v1823 = vunpack.c.0.s8 %v1822
        %v1824 = vperm.slane %v1818, %v1823
        %v1826 = vunpack.c.l.s4 1983009808
        %v1827 = vunpack.c.0.s8 %v1826
        %v1828 = vperm.slane %v1820, %v1827
        %v1829 = vrot.slane %v1802, 4
        %v1830 = vsel %vm971, %v1829, %v1798
        %v1831 = vrot.slane %v1798, 4
        %v1832 = vsel %vm971, %v1802, %v1831
        %v1834 = vunpack.c.l.s4 1983009808
        %v1835 = vunpack.c.0.s8 %v1834
        %v1836 = vperm.slane %v1830, %v1835
        %v1838 = vunpack.c.l.s4 1983009808
        %v1839 = vunpack.c.0.s8 %v1838
        %v1840 = vperm.slane %v1832, %v1839
        %v1841 = vrot.slane %v1804, 4
        %v1842 = vsel %vm971, %v1841, %v1800
        %v1843 = vrot.slane %v1800, 4
        %v1844 = vsel %vm971, %v1804, %v1843
        %v1846 = vunpack.c.l.s4 1983009808
        %v1847 = vunpack.c.0.s8 %v1846
        %v1848 = vperm.slane %v1842, %v1847
        %v1850 = vunpack.c.l.s4 1983009808
        %v1851 = vunpack.c.0.s8 %v1850
        %v1852 = vperm.slane %v1844, %v1851
        %v1853 = vrot.slane %v1824, 4
        %v1854 = vsel %vm971, %v1853, %v1812
        %v1855 = vrot.slane %v1812, 4
        %v1856 = vsel %vm971, %v1824, %v1855
        %v1858 = vunpack.c.l.s4 1934713408
        %v1859 = vunpack.c.0.s8 %v1858
        %v1860 = vperm.slane %v1854, %v1859
        %v1862 = vunpack.c.l.s4 1934713408
        %v1863 = vunpack.c.0.s8 %v1862
        %v1864 = vperm.slane %v1856, %v1863
        %v1865 = vrot.slane %v1828, 4
        %v1866 = vsel %vm971, %v1865, %v1816
        %v1867 = vrot.slane %v1816, 4
        %v1868 = vsel %vm971, %v1828, %v1867
        %v1870 = vunpack.c.l.s4 1934713408
        %v1871 = vunpack.c.0.s8 %v1870
        %v1872 = vperm.slane %v1866, %v1871
        %v1874 = vunpack.c.l.s4 1934713408
        %v1875 = vunpack.c.0.s8 %v1874
        %v1876 = vperm.slane %v1868, %v1875
        %v1877 = vrot.slane %v1848, 4
        %v1878 = vsel %vm971, %v1877, %v1836
        %v1879 = vrot.slane %v1836, 4
        %v1880 = vsel %vm971, %v1848, %v1879
        %v1882 = vunpack.c.l.s4 1934713408
        %v1883 = vunpack.c.0.s8 %v1882
        %v1884 = vperm.slane %v1878, %v1883
        %v1886 = vunpack.c.l.s4 1934713408
        %v1887 = vunpack.c.0.s8 %v1886
        %v1888 = vperm.slane %v1880, %v1887
        %v1889 = vrot.slane %v1852, 4
        %v1890 = vsel %vm971, %v1889, %v1840
        %v1891 = vrot.slane %v1840, 4
        %v1892 = vsel %vm971, %v1852, %v1891
        %v1894 = vunpack.c.l.s4 1934713408
        %v1895 = vunpack.c.0.s8 %v1894
        %v1896 = vperm.slane %v1890, %v1895
        %v1898 = vunpack.c.l.s4 1934713408
        %v1899 = vunpack.c.0.s8 %v1898
        %v1900 = vperm.slane %v1892, %v1899
        %v1901 = vrot.slane %v1884, 4
        %v1902 = vsel %vm971, %v1901, %v1860
        %v1903 = vrot.slane %v1860, 4
        %v1904 = vsel %vm971, %v1884, %v1903
        %v1905 = vrot.slane %v1888, 4
        %v1906 = vsel %vm971, %v1905, %v1864
        %v1907 = vrot.slane %v1864, 4
        %v1908 = vsel %vm971, %v1888, %v1907
        %v1909 = vrot.slane %v1896, 4
        %v1910 = vsel %vm971, %v1909, %v1872
        %v1911 = vrot.slane %v1872, 4
        %v1912 = vsel %vm971, %v1896, %v1911
        %v1913 = vrot.slane %v1900, 4
        %v1914 = vsel %vm971, %v1913, %v1876
        %v1915 = vrot.slane %v1876, 4
        %v1916 = vsel %vm971, %v1900, %v1915
        %1918 = vrot.lane.b32.xlu0 %v1904, 4
        %v1919 = vpop.permute.xlu0 %1918
        %1922 = vrot.lane.b32.xlu0 %v1906, 8
        %v1923 = vpop.permute.xlu0 %1922
        %1926 = vrot.lane.b32.xlu0 %v1908, 12
        %v1927 = vpop.permute.xlu0 %1926
        %1930 = vrot.lane.b32.xlu0 %v1910, 16
        %v1931 = vpop.permute.xlu0 %1930
        %1934 = vrot.lane.b32.xlu0 %v1912, 20
        %v1935 = vpop.permute.xlu0 %1934
        %1938 = vrot.lane.b32.xlu0 %v1914, 24
        %v1939 = vpop.permute.xlu0 %1938
        %1942 = vrot.lane.b32.xlu0 %v1916, 28
        %v1943 = vpop.permute.xlu0 %1942
        %v1945 = vsel %vm1203, %v1902, %v1919
        %v1946 = vsel %vm1412, %v1945, %v1923
        %vm1947 = vcmask 97280
        %v1948 = vsel %vm1947, %v1946, %v1927
        %vm1949 = vcmask 130048
        %v1950 = vsel %vm1949, %v1948, %v1931
        %vm1951 = vcmask 162816
        %v1952 = vsel %vm1951, %v1950, %v1935
        %vm1953 = vcmask 195584
        %v1954 = vsel %vm1953, %v1952, %v1939
        %vm1955 = vcmask 228352
        %v1956 = vsel %vm1955, %v1954, %v1943
        %v1957 = vld [vmem:[#allocation12] sm:$0xff]
        %v1958 = vld [vmem:[#allocation12 + $0x8] sm:$0xff]
        %v1959 = vld [vmem:[#allocation12 + $0x10] sm:$0xff]
        %v1960 = vld [vmem:[#allocation12 + $0x18] sm:$0xff]
        %v1961 = vld [vmem:[%s5] sm:$0x1]
        %v1963 = vperm.slane %v1961, 0
        %v1966 = vsel %vm924, %v1956, 0
        %1968 = vmatpush.msra.mxu0 0.0
        %1969 = vmatpush.msra.mxu0 0.0
        %1970 = vmatpush.msra.mxu0 0.0
        %1971 = vmatpush.msra.mxu0 0.0
        %1972 = vmatpush.msra.mxu0 0.0
        %1973 = vmatpush.msra.mxu0 0.0
        %1974 = vmatpush.msra.mxu0 0.0
        %1975 = vmatpush.msra.mxu0 0.0
        %1976 = vmatpush.msra.mxu0 0.0
        %1977 = vmatpush.msra.mxu0 0.0
        %1978 = vmatpush.msra.mxu0 0.0
        %1979 = vmatpush.msra.mxu0 0.0
        %1980 = vmatpush.msra.mxu0 %v1960
        %1981 = vmatpush.msra.mxu0 %v1959
        %1982 = vmatpush.msra.mxu0 %v1958
        %1983 = vmatpush.msra.mxu0 %v1957
        %1984 = vmatmul.f32.gmra.mxu0 %v1966
        %v1985 = vpop.f32.mrf.mxu0
        %v1986 = vadd.f32 %v1963, %v1985
        %1987 = vdwg.mxu0
        %1988 = vst.msk [vmem:[%s373] sm:$0xff] %vm924, %v1986
        %s1989 = sand.u32 %s187, 1
        %s1990 = scalar_lea.sflag [#allocation6], %s1989
        %s1991 = sand.u32 %s187, 1
        %s1992 = smul.addr %s1991, 8
        %s1993 = scalar_lea.vmem [#allocation13], %s1992
        // Predicated region
        $region69: #{tpu_custom_call.1} parent=43 // pred_check
          %p1994 = pneg %p197
        $region70: #{tpu_custom_call.1} parent=43 // pred_check_branch
          %1996 = sbr.rel (%p1994) target = $region72
        $region71: #{tpu_custom_call.1} parent=43 // pred_region
          %1998 = vsyncadd %s1990, 0
          %s1999 = sadd.s32 %s32, %s31
          %s2000 = smul.addr %s1999, 8
          %s2001 = scalar_lea.hbm %s6, %s2000
          %s2003 = sshll.u32 %s1993, 4
          %s2004 = int_to_ptr.vmem [resolvable:$true] %s2003
          %s2005 = sshll.u32 %s2001, 4
          %s2006 = int_to_ptr.hbm [resolvable:$true] %s2005
          %2008 = dma.vmem_to_hbm [thread:$0]  %s2004, 128, %s2006, %s1990
        $region72: #{tpu_custom_call.1} parent=43 // pred_fallthru
          _
      $region44: #{tpu_custom_call.1} parent=5 // pred_fallthru
        _
      %p2009 = scmp.le.s32.totalorder 2, %s22
      // Predicated region
      $region73: #{tpu_custom_call.1} parent=5 // pred_check
        %p2010 = pneg %p2009
      $region74: #{tpu_custom_call.1} parent=5 // pred_check_branch
        %2012 = sbr.rel (%p2010) target = $region76
      $region75: #{tpu_custom_call.1} parent=5 // pred_region
        %s2013 = ssub.s32 %s22, 2
        // Predicated region
        $region77: #{tpu_custom_call.1} parent=75 // pred_check
          %p2014 = pneg %p203
        $region78: #{tpu_custom_call.1} parent=75 // pred_check_branch
          %2016 = sbr.rel (%p2014) target = $region80
        $region79: #{tpu_custom_call.1} parent=75 // pred_region
          %s2017 = sand.u32 %s188, 1
          %s2018 = scalar_lea.sflag [#allocation6], %s2017
          %s2019 = sand.u32 %s188, 1
          %s2020 = smul.addr %s2019, 8
          %s2021 = scalar_lea.vmem [#allocation13], %s2020
          %2023 = dma.done %s2018, 128
        $region80: #{tpu_custom_call.1} parent=75 // pred_fallthru
          _
      $region76: #{tpu_custom_call.1} parent=5 // pred_fallthru
        _
    $region6: #{tpu_custom_call.1} parent=1 // loop_footer
      %s26 = sadd.s32 1, %s22
    $region7: #{tpu_custom_call.1} parent=1 // loop_footer_branch
      %21 = sbr.rel target = $region3
    $region8: #{tpu_custom_call.1} parent=1 // loop_exit
      _
    %2024 = vsyncpa [#allocation5], 1
    %s2025 = scalar_lea.sflag [#allocation5], 1
    %2026 = vsyncpa %s2025, 1
    %2027 = vsyncpa [#allocation8], 1
    %s2028 = scalar_lea.sflag [#allocation8], 1
    %2029 = vsyncpa %s2028, 1
    %2030 = vsyncpa [#allocation11], 1
    %2031 = vsyncpa [#allocation6], 1
    %s2032 = scalar_lea.sflag [#allocation6], 1
    %2033 = vsyncpa %s2032, 1

</llo_original>
